<compile_context>
chip_gen: v7x
topology: tpu7x:2x2x1
jax: 0.10.0
libtpu: 0.0.40
codegen_flags: <defaults>
</compile_context>

<pallas_src>
import jax
import jax.numpy as jnp
from jax.experimental import pallas as pl
from jax.experimental.pallas import tpu as pltpu

IN_DIM = 28 * 28   # 784
H1, H2, OUT_DIM = 300, 100, 10
H1P, H2P, OUT_PAD = 384, 128, 128   # lane-dense padded widths (multiples of 128)


def mlp_kernel(x_ref, w1_ref, b1_ref, w2_ref, b2_ref, w3_ref, b3_ref, o_ref):
    # x / weights are already bf16; MXU matmuls with f32 accumulation,
    # bias-add + ReLU in f32 on the VPU.
    x = x_ref[...]
    h1 = jnp.dot(x, w1_ref[...], preferred_element_type=jnp.float32)
    h1 = jnp.maximum(h1 + b1_ref[...].astype(jnp.float32), 0.0)

    h2 = jnp.dot(h1.astype(jnp.bfloat16), w2_ref[...],
                 preferred_element_type=jnp.float32)
    h2 = jnp.maximum(h2 + b2_ref[...].astype(jnp.float32), 0.0)

    out = jnp.dot(h2.astype(jnp.bfloat16), w3_ref[...],
                  preferred_element_type=jnp.float32)
    o_ref[...] = (out + b3_ref[...].astype(jnp.float32)).astype(o_ref.dtype)


def _round_up(n, m):
    return ((n + m - 1) // m) * m


def simple_net_forward(x_nchw, params, *, tm=1024):
    """x_nchw: (B, 1, 28, 28).  Returns logits (B, 10) float32."""
    w1, b1, w2, b2, w3, b3 = params
    B = x_nchw.shape[0]

    # bf16 activation stream (ideally the producer already emits bf16).
    x = x_nchw.reshape(B, IN_DIM).astype(jnp.bfloat16)

    # --- batch tiling: no input padding; partial last x block is masked by the DMA.
    if B <= tm:
        tm_eff = B                                   # single block == full batch dim
    else:
        tm_eff = tm                                  # 1024: multiple of 16 (bf16 sublanes)
        if B >= 512:                                 # keep >= 2 grid steps for v7x megacore
            tm_eff = min(tm_eff, _round_up(pl.cdiv(B, 2), 256))
    grid_m = pl.cdiv(B, tm_eff)
    b_out = grid_m * tm_eff                          # only the fresh output is padded
    grid = (grid_m,)

    # --- weights: bf16, zero-padded to lane-dense widths (exact numerics: padded
    #     lanes produce 0 through every layer).  In a jit'd pipeline these pads
    #     are hoisted / done once.
    w1b = jnp.pad(w1, ((0, 0), (0, H1P - H1))).astype(jnp.bfloat16)
    b1b = jnp.pad(b1, ((0, 0), (0, H1P - H1))).astype(jnp.bfloat16)
    w2b = jnp.pad(w2, ((0, H1P - H1), (0, H2P - H2))).astype(jnp.bfloat16)
    b2b = jnp.pad(b2, ((0, 0), (0, H2P - H2))).astype(jnp.bfloat16)
    w3b = jnp.pad(w3, ((0, H2P - H2), (0, OUT_PAD - OUT_DIM))).astype(jnp.bfloat16)
    b3b = jnp.pad(b3, ((0, 0), (0, OUT_PAD - OUT_DIM))).astype(jnp.bfloat16)

    def weight_resident(shape):
        # Same block index every grid step -> DMA'd once, stays VMEM-resident.
        return pl.BlockSpec(shape, lambda i: (0, 0))

    flops = 2 * b_out * (IN_DIM * H1P + H1P * H2P + H2P * OUT_PAD)
    weight_bytes = 2 * (w1b.size + b1b.size + w2b.size + b2b.size
                        + w3b.size + b3b.size)
    bytes_accessed = B * IN_DIM * 2 + b_out * OUT_PAD * 2 + weight_bytes

    out_padded = pl.pallas_call(
        mlp_kernel,
        out_shape=jax.ShapeDtypeStruct((b_out, OUT_PAD), jnp.bfloat16),
        grid=grid,
        in_specs=[
            pl.BlockSpec((tm_eff, IN_DIM), lambda i: (i, 0)),   # x tile (bf16)
            weight_resident((IN_DIM, H1P)),                     # w1
            weight_resident((1, H1P)),                          # b1
            weight_resident((H1P, H2P)),                        # w2
            weight_resident((1, H2P)),                          # b2
            weight_resident((H2P, OUT_PAD)),                    # w3
            weight_resident((1, OUT_PAD)),                      # b3
        ],
        out_specs=pl.BlockSpec((tm_eff, OUT_PAD), lambda i: (i, 0)),
        compiler_params=pltpu.CompilerParams(
            dimension_semantics=("parallel",),
        ),
        cost_estimate=pl.CostEstimate(
            flops=flops, transcendentals=0, bytes_accessed=bytes_accessed),
    )(x, w1b, b1b, w2b, b2b, w3b, b3b)

    return out_padded[:B, :OUT_DIM].astype(jnp.float32)


def init_params(key):
    """Deterministic init mimicking nn.Linear default U[-1/sqrt(fan_in), +...]."""
    dims = [(IN_DIM, H1), (H1, H2), (H2, OUT_DIM)]
    params = []
    for fan_in, fan_out in dims:
        kw, kb, key = jax.random.split(key, 3)
        bound = 1.0 / (fan_in ** 0.5)
        w = jax.random.uniform(kw, (fan_in, fan_out), jnp.float32, -bound, bound)
        b = jax.random.uniform(kb, (1, fan_out), jnp.float32, -bound, bound)
        params += [w, b]
    return tuple(params)


def reference_forward(x_nchw, params):
    w1, b1, w2, b2, w3, b3 = params
    x = x_nchw.reshape(x_nchw.shape[0], IN_DIM)
    h1 = jnp.maximum(x @ w1 + b1, 0.0)
    h2 = jnp.maximum(h1 @ w2 + b2, 0.0)
    return h2 @ w3 + b3


if __name__ == "__main__":
    key = jax.random.PRNGKey(0)
    kx, kp = jax.random.split(key)
    x = jax.random.normal(kx, (8, 1, 28, 28), jnp.float32)  # small MNIST-like batch
    params = init_params(kp)

    out = simple_net_forward(x, params)
    out = jax.block_until_ready(out)

    ref = reference_forward(x, params)
    assert out.shape == (8, 10)
    # bf16 x / weights / logits (f32 accumulate): loose tolerance.
    assert jnp.allclose(out, ref, atol=3e-2, rtol=3e-2), (out, ref)
    print("KERNEL_OK")
</pallas_src>

<mosaic_0001>
module attributes {stable_mosaic.version = 11 : i64} {
  func.func @mlp_kernel(%arg0: i32, %arg1: memref<8x784xbf16, #tpu.memory_space<vmem>>, %arg2: memref<784x384xbf16, #tpu.memory_space<vmem>>, %arg3: memref<1x384xbf16, #tpu.memory_space<vmem>>, %arg4: memref<384x128xbf16, #tpu.memory_space<vmem>>, %arg5: memref<1x128xbf16, #tpu.memory_space<vmem>>, %arg6: memref<128x128xbf16, #tpu.memory_space<vmem>>, %arg7: memref<1x128xbf16, #tpu.memory_space<vmem>>, %arg8: memref<8x128xbf16, #tpu.memory_space<vmem>>) attributes {dimension_semantics = [#tpu.dimension_semantics<parallel>], iteration_bounds = array<i64: 1>, scalar_prefetch = 0 : i64, scratch_operands = 0 : i64, tpu.core_type = #tpu.core_type<tc>, window_params = [{transform_indices = @transform_0, window_bounds = array<i64: 8, 784>}, {pipeline_mode = #tpu.pipeline_mode<synchronous>, transform_indices = @transform_1, window_bounds = array<i64: 784, 384>}, {pipeline_mode = #tpu.pipeline_mode<synchronous>, transform_indices = @transform_2, window_bounds = array<i64: 1, 384>}, {pipeline_mode = #tpu.pipeline_mode<synchronous>, transform_indices = @transform_3, window_bounds = array<i64: 384, 128>}, {pipeline_mode = #tpu.pipeline_mode<synchronous>, transform_indices = @transform_4, window_bounds = array<i64: 1, 128>}, {pipeline_mode = #tpu.pipeline_mode<synchronous>, transform_indices = @transform_5, window_bounds = array<i64: 128, 128>}, {pipeline_mode = #tpu.pipeline_mode<synchronous>, transform_indices = @transform_6, window_bounds = array<i64: 1, 128>}, {transform_indices = @transform_7, window_bounds = array<i64: 8, 128>}]} {
    %c0 = arith.constant 0 : index
    %c0_0 = arith.constant 0 : index
    %0 = vector.load %arg1[%c0, %c0_0] : memref<8x784xbf16, #tpu.memory_space<vmem>>, vector<8x784xbf16>
    %c0_1 = arith.constant 0 : index
    %c0_2 = arith.constant 0 : index
    %1 = vector.load %arg2[%c0_1, %c0_2] : memref<784x384xbf16, #tpu.memory_space<vmem>>, vector<784x384xbf16>
    %cst = arith.constant dense<0.000000e+00> : vector<8x384xf32>
    %2 = tpu.matmul %0, %1, %cst {dimension_numbers = #tpu.dot_dimension_numbers<[1], [0], [0], [1], [0, 0, 1, 1], [], []>} : vector<8x784xbf16>, vector<784x384xbf16>, vector<8x384xf32> -> vector<8x384xf32>
    %c0_3 = arith.constant 0 : index
    %c0_4 = arith.constant 0 : index
    %3 = vector.load %arg3[%c0_3, %c0_4] : memref<1x384xbf16, #tpu.memory_space<vmem>>, vector<1x384xbf16>
    %4 = arith.extf %3 : vector<1x384xbf16> to vector<1x384xf32>
    %5 = vector.broadcast %4 : vector<1x384xf32> to vector<8x384xf32>
    %6 = arith.addf %2, %5 : vector<8x384xf32>
    %cst_5 = arith.constant 0.000000e+00 : f32
    %7 = vector.broadcast %cst_5 : f32 to vector<8x384xf32>
    %8 = arith.maximumf %6, %7 : vector<8x384xf32>
    %9 = arith.truncf %8 : vector<8x384xf32> to vector<8x384xbf16>
    %c0_6 = arith.constant 0 : index
    %c0_7 = arith.constant 0 : index
    %10 = vector.load %arg4[%c0_6, %c0_7] : memref<384x128xbf16, #tpu.memory_space<vmem>>, vector<384x128xbf16>
    %cst_8 = arith.constant dense<0.000000e+00> : vector<8x128xf32>
    %11 = tpu.matmul %9, %10, %cst_8 {dimension_numbers = #tpu.dot_dimension_numbers<[1], [0], [0], [1], [0, 0, 1, 1], [], []>} : vector<8x384xbf16>, vector<384x128xbf16>, vector<8x128xf32> -> vector<8x128xf32>
    %c0_9 = arith.constant 0 : index
    %c0_10 = arith.constant 0 : index
    %12 = vector.load %arg5[%c0_9, %c0_10] : memref<1x128xbf16, #tpu.memory_space<vmem>>, vector<1x128xbf16>
    %13 = arith.extf %12 : vector<1x128xbf16> to vector<1x128xf32>
    %14 = vector.broadcast %13 : vector<1x128xf32> to vector<8x128xf32>
    %15 = arith.addf %11, %14 : vector<8x128xf32>
    %cst_11 = arith.constant 0.000000e+00 : f32
    %16 = vector.broadcast %cst_11 : f32 to vector<8x128xf32>
    %17 = arith.maximumf %15, %16 : vector<8x128xf32>
    %18 = arith.truncf %17 : vector<8x128xf32> to vector<8x128xbf16>
    %c0_12 = arith.constant 0 : index
    %c0_13 = arith.constant 0 : index
    %19 = vector.load %arg6[%c0_12, %c0_13] : memref<128x128xbf16, #tpu.memory_space<vmem>>, vector<128x128xbf16>
    %cst_14 = arith.constant dense<0.000000e+00> : vector<8x128xf32>
    %20 = tpu.matmul %18, %19, %cst_14 {dimension_numbers = #tpu.dot_dimension_numbers<[1], [0], [0], [1], [0, 0, 1, 1], [], []>} : vector<8x128xbf16>, vector<128x128xbf16>, vector<8x128xf32> -> vector<8x128xf32>
    %c0_15 = arith.constant 0 : index
    %c0_16 = arith.constant 0 : index
    %21 = vector.load %arg7[%c0_15, %c0_16] : memref<1x128xbf16, #tpu.memory_space<vmem>>, vector<1x128xbf16>
    %22 = arith.extf %21 : vector<1x128xbf16> to vector<1x128xf32>
    %23 = vector.broadcast %22 : vector<1x128xf32> to vector<8x128xf32>
    %24 = arith.addf %20, %23 : vector<8x128xf32>
    %25 = arith.truncf %24 : vector<8x128xf32> to vector<8x128xbf16>
    %c0_17 = arith.constant 0 : index
    %c0_18 = arith.constant 0 : index
    %26 = vector.load %arg8[%c0_17, %c0_18] : memref<8x128xbf16, #tpu.memory_space<vmem>>, vector<8x128xbf16>
    tpu.vector_store %arg8[%c0_17, %c0_18], %25 {strides = array<i32>} : memref<8x128xbf16, #tpu.memory_space<vmem>>, vector<8x128xbf16>,
    return
  }
  func.func @transform_0(%arg0: i32) -> (i32, i32) {
    %c0_i32 = arith.constant 0 : i32
    %c0_i32_0 = arith.constant 0 : i32
    return %arg0, %c0_i32 : i32, i32
  }
  func.func @transform_1(%arg0: i32) -> (i32, i32) {
    %c0_i32 = arith.constant 0 : i32
    %c0_i32_0 = arith.constant 0 : i32
    %c0_i32_1 = arith.constant 0 : i32
    return %c0_i32, %c0_i32_0 : i32, i32
  }
  func.func @transform_2(%arg0: i32) -> (i32, i32) {
    %c0_i32 = arith.constant 0 : i32
    %c0_i32_0 = arith.constant 0 : i32
    %c0_i32_1 = arith.constant 0 : i32
    return %c0_i32, %c0_i32_0 : i32, i32
  }
  func.func @transform_3(%arg0: i32) -> (i32, i32) {
    %c0_i32 = arith.constant 0 : i32
    %c0_i32_0 = arith.constant 0 : i32
    %c0_i32_1 = arith.constant 0 : i32
    return %c0_i32, %c0_i32_0 : i32, i32
  }
  func.func @transform_4(%arg0: i32) -> (i32, i32) {
    %c0_i32 = arith.constant 0 : i32
    %c0_i32_0 = arith.constant 0 : i32
    %c0_i32_1 = arith.constant 0 : i32
    return %c0_i32, %c0_i32_0 : i32, i32
  }
  func.func @transform_5(%arg0: i32) -> (i32, i32) {
    %c0_i32 = arith.constant 0 : i32
    %c0_i32_0 = arith.constant 0 : i32
    %c0_i32_1 = arith.constant 0 : i32
    return %c0_i32, %c0_i32_0 : i32, i32
  }
  func.func @transform_6(%arg0: i32) -> (i32, i32) {
    %c0_i32 = arith.constant 0 : i32
    %c0_i32_0 = arith.constant 0 : i32
    %c0_i32_1 = arith.constant 0 : i32
    return %c0_i32, %c0_i32_0 : i32, i32
  }
  func.func @transform_7(%arg0: i32) -> (i32, i32) {
    %c0_i32 = arith.constant 0 : i32
    %c0_i32_0 = arith.constant 0 : i32
    return %arg0, %c0_i32 : i32, i32
  }
}

</mosaic_0001>

<llo_original>
// kernel: tpu_custom_call.1
$region0: #{tpu_custom_call.1}
  #allocation0 [shape = 'u32[]', space=smem, size = 0x4, offset = 0x4, fixed_abs, tag = 'smem constant byte address 0x4 - core index']
  #allocation1 [shape = 'u32[144,128]{1,0:T(1,128)}', space=vmem, size = 0x12000, scoped, tag = 'internal scratch']
  %s0 = inlined_call_operand.hbm [shape: bf16[8,784], index: 0, kind: input, shape index: {}]
  %s1 = inlined_call_operand.hbm [shape: bf16[784,384], index: 1, kind: input, shape index: {}]
  %s2 = inlined_call_operand.vmem [shape: bf16[1,384], index: 2, kind: input, shape index: {}]
  %s3 = inlined_call_operand.hbm [shape: bf16[384,128], index: 3, kind: input, shape index: {}]
  %s4 = inlined_call_operand.vmem [shape: bf16[1,128], index: 4, kind: input, shape index: {}]
  %s5 = inlined_call_operand.hbm [shape: bf16[128,128], index: 5, kind: input, shape index: {}]
  %s6 = inlined_call_operand.vmem [shape: bf16[1,128], index: 6, kind: input, shape index: {}]
  %s7 = inlined_call_operand.hbm [shape: bf16[8,128], index: 7, kind: output, shape index: {}]
  %s8 = sld [smem:[#allocation0]]
  $region54: #{tpu_custom_call.1} parent=0
    _
  %s10 = ssub.s32 1, %s8
  %s11 = scalar_select 0, %s10, %s8
  $region1: #{tpu_custom_call.1} parent=0
    #allocation2 [shape = 'u8[14336]{0}', space=vmem, size = 0x3800, scoped, tag = 'input window, operand 0, single buffered']
    #allocation3 [shape = 's32[1]{0}', space=sflag, size = 0x4, scoped, tag = 'scoped memory for tpu_custom_call.1']
    #allocation4 [shape = 's32[1]{0}', space=sflag, size = 0x4, scoped, tag = 'scoped memory for tpu_custom_call.1']
    #allocation5 [shape = 'u8[602112]{0}', space=vmem, size = 0x93000, scoped, tag = 'input window, operand 1, single buffered']
    #allocation6 [shape = 's32[1]{0}', space=sflag, size = 0x4, scoped, tag = 'scoped memory for tpu_custom_call.1']
    #allocation7 [shape = 'u8[98304]{0}', space=vmem, size = 0x18000, scoped, tag = 'input window, operand 3, single buffered']
    #allocation8 [shape = 'u8[32768]{0}', space=vmem, size = 0x8000, scoped, tag = 'input window, operand 5, single buffered']
    #allocation9 [shape = 's32[1]{0}', space=sflag, size = 0x4, scoped, tag = 'scoped memory for tpu_custom_call.1']
    #allocation10 [shape = 'u8[2048]{0}', space=vmem, size = 0x800, scoped, tag = 'output window, operand 0, single buffered']
    %12 = vsyncpa [#allocation3], 0
    %13 = vsyncpa [#allocation6], 0
    %14 = vsyncpa [#allocation9], 0
    %15 = vsyncpa [#allocation4], 0
    // Predicated region
    $region2: #{tpu_custom_call.1} parent=1 // pred_check
      _
    $region3: #{tpu_custom_call.1} parent=1 // pred_check_branch
      %17 = sbr.rel (0) target = $region5
    $region4: #{tpu_custom_call.1} parent=1 // pred_region
      %s19 = ssub.s32 448, 448
      %20 = vsyncadd [#allocation3], %s19
      %s22 = sshll.u32 [#allocation2], 4
      %s23 = int_to_ptr.vmem [resolvable:$true] %s22
      %25 = dma.hbm_to_vmem [thread:$0]  %s0, 448, %s23, [#allocation3]
    $region5: #{tpu_custom_call.1} parent=1 // pred_fallthru
      _
    // Predicated region
    $region6: #{tpu_custom_call.1} parent=1 // pred_check
      _
    $region7: #{tpu_custom_call.1} parent=1 // pred_check_branch
      %27 = sbr.rel (0) target = $region9
    $region8: #{tpu_custom_call.1} parent=1 // pred_region
      %s29 = ssub.s32 18816, 18816
      %30 = vsyncadd [#allocation6], %s29
      %s31 = sshll.u32 [#allocation5], 4
      %s32 = int_to_ptr.vmem [resolvable:$true] %s31
      %37 = dma.hbm_to_vmem [thread:$0]  %s1, 18816, %s32, [#allocation6], 192, 192, 12
    $region9: #{tpu_custom_call.1} parent=1 // pred_fallthru
      _
    // Predicated region
    $region10: #{tpu_custom_call.1} parent=1 // pred_check
      _
    $region11: #{tpu_custom_call.1} parent=1 // pred_check_branch
      %39 = sbr.rel (0) target = $region13
    $region12: #{tpu_custom_call.1} parent=1 // pred_region
      _
    $region13: #{tpu_custom_call.1} parent=1 // pred_fallthru
      _
    // Predicated region
    $region14: #{tpu_custom_call.1} parent=1 // pred_check
      _
    $region15: #{tpu_custom_call.1} parent=1 // pred_check_branch
      %41 = sbr.rel (0) target = $region17
    $region16: #{tpu_custom_call.1} parent=1 // pred_region
      %s43 = ssub.s32 3072, 3072
      %44 = vsyncadd [#allocation6], %s43
      %s45 = sshll.u32 [#allocation7], 4
      %s46 = int_to_ptr.vmem [resolvable:$true] %s45
      %51 = dma.hbm_to_vmem [thread:$0]  %s3, 3072, %s46, [#allocation6], 64, 64, 4
    $region17: #{tpu_custom_call.1} parent=1 // pred_fallthru
      _
    // Predicated region
    $region18: #{tpu_custom_call.1} parent=1 // pred_check
      _
    $region19: #{tpu_custom_call.1} parent=1 // pred_check_branch
      %53 = sbr.rel (0) target = $region21
    $region20: #{tpu_custom_call.1} parent=1 // pred_region
      _
    $region21: #{tpu_custom_call.1} parent=1 // pred_fallthru
      _
    // Predicated region
    $region22: #{tpu_custom_call.1} parent=1 // pred_check
      _
    $region23: #{tpu_custom_call.1} parent=1 // pred_check_branch
      %55 = sbr.rel (0) target = $region25
    $region24: #{tpu_custom_call.1} parent=1 // pred_region
      %s57 = ssub.s32 1024, 1024
      %58 = vsyncadd [#allocation9], %s57
      %s59 = sshll.u32 [#allocation8], 4
      %s60 = int_to_ptr.vmem [resolvable:$true] %s59
      %65 = dma.hbm_to_vmem [thread:$0]  %s5, 1024, %s60, [#allocation9], 64, 64, 4
    $region25: #{tpu_custom_call.1} parent=1 // pred_fallthru
      _
    // Predicated region
    $region26: #{tpu_custom_call.1} parent=1 // pred_check
      _
    $region27: #{tpu_custom_call.1} parent=1 // pred_check_branch
      %67 = sbr.rel (0) target = $region29
    $region28: #{tpu_custom_call.1} parent=1 // pred_region
      _
    $region29: #{tpu_custom_call.1} parent=1 // pred_fallthru
      _
    // Predicated region
    $region30: #{tpu_custom_call.1} parent=1 // pred_check
      _
    $region31: #{tpu_custom_call.1} parent=1 // pred_check_branch
      %69 = sbr.rel (0) target = $region33
    $region32: #{tpu_custom_call.1} parent=1 // pred_region
      %70 = dma.done [#allocation3], 448
    $region33: #{tpu_custom_call.1} parent=1 // pred_fallthru
      _
    // Predicated region
    $region34: #{tpu_custom_call.1} parent=1 // pred_check
      _
    $region35: #{tpu_custom_call.1} parent=1 // pred_check_branch
      %72 = sbr.rel (0) target = $region37
    $region36: #{tpu_custom_call.1} parent=1 // pred_region
      %73 = dma.done [#allocation6], 18816
    $region37: #{tpu_custom_call.1} parent=1 // pred_fallthru
      _
    // Predicated region
    $region38: #{tpu_custom_call.1} parent=1 // pred_check
      _
    $region39: #{tpu_custom_call.1} parent=1 // pred_check_branch
      %75 = sbr.rel (0) target = $region41
    $region40: #{tpu_custom_call.1} parent=1 // pred_region
      %76 = dma.done [#allocation6], 3072
    $region41: #{tpu_custom_call.1} parent=1 // pred_fallthru
      _
    // Predicated region
    $region42: #{tpu_custom_call.1} parent=1 // pred_check
      _
    $region43: #{tpu_custom_call.1} parent=1 // pred_check_branch
      %78 = sbr.rel (0) target = $region45
    $region44: #{tpu_custom_call.1} parent=1 // pred_region
      %79 = dma.done [#allocation9], 1024
    $region45: #{tpu_custom_call.1} parent=1 // pred_fallthru
      _
    %v81 = vld [vmem:[#allocation2] sm:$0xff]
    %v82 = vld [vmem:[#allocation2 + $0x8] sm:$0xff]
    %v83 = vld [vmem:[#allocation2 + $0x10] sm:$0xff]
    %v84 = vld [vmem:[#allocation2 + $0x18] sm:$0xf]
    %v85 = vld [vmem:[#allocation5] sm:$0xff]
    %v86 = vld [vmem:[#allocation5 + $0x8] sm:$0xf]
    %v87 = vld [vmem:[#allocation5 + $0xc] sm:$0xff]
    %v88 = vld [vmem:[#allocation5 + $0x14] sm:$0xf]
    %v89 = vld [vmem:[#allocation5 + $0x18] sm:$0xff]
    %v90 = vld [vmem:[#allocation5 + $0x20] sm:$0xf]
    %v91 = vld [vmem:[#allocation5 + $0x24] sm:$0xff]
    %v92 = vld [vmem:[#allocation5 + $0x2c] sm:$0xf]
    %v93 = vld [vmem:[#allocation5 + $0x30] sm:$0xff]
    %v94 = vld [vmem:[#allocation5 + $0x38] sm:$0xf]
    %v95 = vld [vmem:[#allocation5 + $0x3c] sm:$0xff]
    %v96 = vld [vmem:[#allocation5 + $0x44] sm:$0xf]
    %v97 = vld [vmem:[#allocation5 + $0x48] sm:$0xff]
    %v98 = vld [vmem:[#allocation5 + $0x50] sm:$0xf]
    %v99 = vld [vmem:[#allocation5 + $0x54] sm:$0xff]
    %v100 = vld [vmem:[#allocation5 + $0x5c] sm:$0xf]
    %v101 = vld [vmem:[#allocation5 + $0x60] sm:$0xff]
    %v102 = vld [vmem:[#allocation5 + $0x68] sm:$0xf]
    %v103 = vld [vmem:[#allocation5 + $0x6c] sm:$0xff]
    %v104 = vld [vmem:[#allocation5 + $0x74] sm:$0xf]
    %v105 = vld [vmem:[#allocation5 + $0x78] sm:$0xff]
    %v106 = vld [vmem:[#allocation5 + $0x80] sm:$0xf]
    %v107 = vld [vmem:[#allocation5 + $0x84] sm:$0xff]
    %v108 = vld [vmem:[#allocation5 + $0x8c] sm:$0xf]
    %v109 = vld [vmem:[#allocation5 + $0x90] sm:$0xff]
    %v110 = vld [vmem:[#allocation5 + $0x98] sm:$0xf]
    %v111 = vld [vmem:[#allocation5 + $0x9c] sm:$0xff]
    %v112 = vld [vmem:[#allocation5 + $0xa4] sm:$0xf]
    %v113 = vld [vmem:[#allocation5 + $0xa8] sm:$0xff]
    %v114 = vld [vmem:[#allocation5 + $0xb0] sm:$0xf]
    %v115 = vld [vmem:[#allocation5 + $0xb4] sm:$0xff]
    %v116 = vld [vmem:[#allocation5 + $0xbc] sm:$0xf]
    %v117 = vld [vmem:[#allocation5 + $0xc0] sm:$0xff]
    %v118 = vld [vmem:[#allocation5 + $0xc8] sm:$0xf]
    %v119 = vld [vmem:[#allocation5 + $0xcc] sm:$0xff]
    %v120 = vld [vmem:[#allocation5 + $0xd4] sm:$0xf]
    %v121 = vld [vmem:[#allocation5 + $0xd8] sm:$0xff]
    %v122 = vld [vmem:[#allocation5 + $0xe0] sm:$0xf]
    %v123 = vld [vmem:[#allocation5 + $0xe4] sm:$0xff]
    %v124 = vld [vmem:[#allocation5 + $0xec] sm:$0xf]
    %v125 = vld [vmem:[#allocation5 + $0xf0] sm:$0xff]
    %v126 = vld [vmem:[#allocation5 + $0xf8] sm:$0xf]
    %v127 = vld [vmem:[#allocation5 + $0xfc] sm:$0xff]
    %v128 = vld [vmem:[#allocation5 + $0x104] sm:$0xf]
    %v129 = vld [vmem:[#allocation5 + $0x108] sm:$0xff]
    %v130 = vld [vmem:[#allocation5 + $0x110] sm:$0xf]
    %v131 = vld [vmem:[#allocation5 + $0x114] sm:$0xff]
    %v132 = vld [vmem:[#allocation5 + $0x11c] sm:$0xf]
    %v133 = vld [vmem:[#allocation5 + $0x120] sm:$0xff]
    %v134 = vld [vmem:[#allocation5 + $0x128] sm:$0xf]
    %v135 = vld [vmem:[#allocation5 + $0x12c] sm:$0xff]
    %v136 = vld [vmem:[#allocation5 + $0x134] sm:$0xf]
    %v137 = vld [vmem:[#allocation5 + $0x138] sm:$0xff]
    %v138 = vld [vmem:[#allocation5 + $0x140] sm:$0xf]
    %v139 = vld [vmem:[#allocation5 + $0x144] sm:$0xff]
    %v140 = vld [vmem:[#allocation5 + $0x14c] sm:$0xf]
    %v141 = vld [vmem:[#allocation5 + $0x150] sm:$0xff]
    %v142 = vld [vmem:[#allocation5 + $0x158] sm:$0xf]
    %v143 = vld [vmem:[#allocation5 + $0x15c] sm:$0xff]
    %v144 = vld [vmem:[#allocation5 + $0x164] sm:$0xf]
    %v145 = vld [vmem:[#allocation5 + $0x168] sm:$0xff]
    %v146 = vld [vmem:[#allocation5 + $0x170] sm:$0xf]
    %v147 = vld [vmem:[#allocation5 + $0x174] sm:$0xff]
    %v148 = vld [vmem:[#allocation5 + $0x17c] sm:$0xf]
    %v149 = vld [vmem:[#allocation5 + $0x180] sm:$0xff]
    %v150 = vld [vmem:[#allocation5 + $0x188] sm:$0xf]
    %v151 = vld [vmem:[#allocation5 + $0x18c] sm:$0xff]
    %v152 = vld [vmem:[#allocation5 + $0x194] sm:$0xf]
    %v153 = vld [vmem:[#allocation5 + $0x198] sm:$0xff]
    %v154 = vld [vmem:[#allocation5 + $0x1a0] sm:$0xf]
    %v155 = vld [vmem:[#allocation5 + $0x1a4] sm:$0xff]
    %v156 = vld [vmem:[#allocation5 + $0x1ac] sm:$0xf]
    %v157 = vld [vmem:[#allocation5 + $0x1b0] sm:$0xff]
    %v158 = vld [vmem:[#allocation5 + $0x1b8] sm:$0xf]
    %v159 = vld [vmem:[#allocation5 + $0x1bc] sm:$0xff]
    %v160 = vld [vmem:[#allocation5 + $0x1c4] sm:$0xf]
    %v161 = vld [vmem:[#allocation5 + $0x1c8] sm:$0xff]
    %v162 = vld [vmem:[#allocation5 + $0x1d0] sm:$0xf]
    %v163 = vld [vmem:[#allocation5 + $0x1d4] sm:$0xff]
    %v164 = vld [vmem:[#allocation5 + $0x1dc] sm:$0xf]
    %v165 = vld [vmem:[#allocation5 + $0x1e0] sm:$0xff]
    %v166 = vld [vmem:[#allocation5 + $0x1e8] sm:$0xf]
    %v167 = vld [vmem:[#allocation5 + $0x1ec] sm:$0xff]
    %v168 = vld [vmem:[#allocation5 + $0x1f4] sm:$0xf]
    %v169 = vld [vmem:[#allocation5 + $0x1f8] sm:$0xff]
    %v170 = vld [vmem:[#allocation5 + $0x200] sm:$0xf]
    %v171 = vld [vmem:[#allocation5 + $0x204] sm:$0xff]
    %v172 = vld [vmem:[#allocation5 + $0x20c] sm:$0xf]
    %v173 = vld [vmem:[#allocation5 + $0x210] sm:$0xff]
    %v174 = vld [vmem:[#allocation5 + $0x218] sm:$0xf]
    %v175 = vld [vmem:[#allocation5 + $0x21c] sm:$0xff]
    %v176 = vld [vmem:[#allocation5 + $0x224] sm:$0xf]
    %v177 = vld [vmem:[#allocation5 + $0x228] sm:$0xff]
    %v178 = vld [vmem:[#allocation5 + $0x230] sm:$0xf]
    %v179 = vld [vmem:[#allocation5 + $0x234] sm:$0xff]
    %v180 = vld [vmem:[#allocation5 + $0x23c] sm:$0xf]
    %v181 = vld [vmem:[#allocation5 + $0x240] sm:$0xff]
    %v182 = vld [vmem:[#allocation5 + $0x248] sm:$0xf]
    %v183 = vld [vmem:[#allocation5 + $0x24c] sm:$0xff]
    %v184 = vld [vmem:[#allocation5 + $0x254] sm:$0xf]
    %v185 = vld [vmem:[#allocation5 + $0x258] sm:$0xff]
    %v186 = vld [vmem:[#allocation5 + $0x260] sm:$0xf]
    %v187 = vld [vmem:[#allocation5 + $0x264] sm:$0xff]
    %v188 = vld [vmem:[#allocation5 + $0x26c] sm:$0xf]
    %v189 = vld [vmem:[#allocation5 + $0x270] sm:$0xff]
    %v190 = vld [vmem:[#allocation5 + $0x278] sm:$0xf]
    %v191 = vld [vmem:[#allocation5 + $0x27c] sm:$0xff]
    %v192 = vld [vmem:[#allocation5 + $0x284] sm:$0xf]
    %v193 = vld [vmem:[#allocation5 + $0x288] sm:$0xff]
    %v194 = vld [vmem:[#allocation5 + $0x290] sm:$0xf]
    %v195 = vld [vmem:[#allocation5 + $0x294] sm:$0xff]
    %v196 = vld [vmem:[#allocation5 + $0x29c] sm:$0xf]
    %v197 = vld [vmem:[#allocation5 + $0x2a0] sm:$0xff]
    %v198 = vld [vmem:[#allocation5 + $0x2a8] sm:$0xf]
    %v199 = vld [vmem:[#allocation5 + $0x2ac] sm:$0xff]
    %v200 = vld [vmem:[#allocation5 + $0x2b4] sm:$0xf]
    %v201 = vld [vmem:[#allocation5 + $0x2b8] sm:$0xff]
    %v202 = vld [vmem:[#allocation5 + $0x2c0] sm:$0xf]
    %v203 = vld [vmem:[#allocation5 + $0x2c4] sm:$0xff]
    %v204 = vld [vmem:[#allocation5 + $0x2cc] sm:$0xf]
    %v205 = vld [vmem:[#allocation5 + $0x2d0] sm:$0xff]
    %v206 = vld [vmem:[#allocation5 + $0x2d8] sm:$0xf]
    %v207 = vld [vmem:[#allocation5 + $0x2dc] sm:$0xff]
    %v208 = vld [vmem:[#allocation5 + $0x2e4] sm:$0xf]
    %v209 = vld [vmem:[#allocation5 + $0x2e8] sm:$0xff]
    %v210 = vld [vmem:[#allocation5 + $0x2f0] sm:$0xf]
    %v211 = vld [vmem:[#allocation5 + $0x2f4] sm:$0xff]
    %v212 = vld [vmem:[#allocation5 + $0x2fc] sm:$0xf]
    %v213 = vld [vmem:[#allocation5 + $0x300] sm:$0xff]
    %v214 = vld [vmem:[#allocation5 + $0x308] sm:$0xf]
    %v215 = vld [vmem:[#allocation5 + $0x30c] sm:$0xff]
    %v216 = vld [vmem:[#allocation5 + $0x314] sm:$0xf]
    %v217 = vld [vmem:[#allocation5 + $0x318] sm:$0xff]
    %v218 = vld [vmem:[#allocation5 + $0x320] sm:$0xf]
    %v219 = vld [vmem:[#allocation5 + $0x324] sm:$0xff]
    %v220 = vld [vmem:[#allocation5 + $0x32c] sm:$0xf]
    %v221 = vld [vmem:[#allocation5 + $0x330] sm:$0xff]
    %v222 = vld [vmem:[#allocation5 + $0x338] sm:$0xf]
    %v223 = vld [vmem:[#allocation5 + $0x33c] sm:$0xff]
    %v224 = vld [vmem:[#allocation5 + $0x344] sm:$0xf]
    %v225 = vld [vmem:[#allocation5 + $0x348] sm:$0xff]
    %v226 = vld [vmem:[#allocation5 + $0x350] sm:$0xf]
    %v227 = vld [vmem:[#allocation5 + $0x354] sm:$0xff]
    %v228 = vld [vmem:[#allocation5 + $0x35c] sm:$0xf]
    %v229 = vld [vmem:[#allocation5 + $0x360] sm:$0xff]
    %v230 = vld [vmem:[#allocation5 + $0x368] sm:$0xf]
    %v231 = vld [vmem:[#allocation5 + $0x36c] sm:$0xff]
    %v232 = vld [vmem:[#allocation5 + $0x374] sm:$0xf]
    %v233 = vld [vmem:[#allocation5 + $0x378] sm:$0xff]
    %v234 = vld [vmem:[#allocation5 + $0x380] sm:$0xf]
    %v235 = vld [vmem:[#allocation5 + $0x384] sm:$0xff]
    %v236 = vld [vmem:[#allocation5 + $0x38c] sm:$0xf]
    %v237 = vld [vmem:[#allocation5 + $0x390] sm:$0xff]
    %v238 = vld [vmem:[#allocation5 + $0x398] sm:$0xf]
    %v239 = vld [vmem:[#allocation5 + $0x39c] sm:$0xff]
    %v240 = vld [vmem:[#allocation5 + $0x3a4] sm:$0xf]
    %v241 = vld [vmem:[#allocation5 + $0x3a8] sm:$0xff]
    %v242 = vld [vmem:[#allocation5 + $0x3b0] sm:$0xf]
    %v243 = vld [vmem:[#allocation5 + $0x3b4] sm:$0xff]
    %v244 = vld [vmem:[#allocation5 + $0x3bc] sm:$0xf]
    %v245 = vld [vmem:[#allocation5 + $0x3c0] sm:$0xff]
    %v246 = vld [vmem:[#allocation5 + $0x3c8] sm:$0xf]
    %v247 = vld [vmem:[#allocation5 + $0x3cc] sm:$0xff]
    %v248 = vld [vmem:[#allocation5 + $0x3d4] sm:$0xf]
    %v249 = vld [vmem:[#allocation5 + $0x3d8] sm:$0xff]
    %v250 = vld [vmem:[#allocation5 + $0x3e0] sm:$0xf]
    %v251 = vld [vmem:[#allocation5 + $0x3e4] sm:$0xff]
    %v252 = vld [vmem:[#allocation5 + $0x3ec] sm:$0xf]
    %v253 = vld [vmem:[#allocation5 + $0x3f0] sm:$0xff]
    %v254 = vld [vmem:[#allocation5 + $0x3f8] sm:$0xf]
    %v255 = vld [vmem:[#allocation5 + $0x3fc] sm:$0xff]
    %v256 = vld [vmem:[#allocation5 + $0x404] sm:$0xf]
    %v257 = vld [vmem:[#allocation5 + $0x408] sm:$0xff]
    %v258 = vld [vmem:[#allocation5 + $0x410] sm:$0xf]
    %v259 = vld [vmem:[#allocation5 + $0x414] sm:$0xff]
    %v260 = vld [vmem:[#allocation5 + $0x41c] sm:$0xf]
    %v261 = vld [vmem:[#allocation5 + $0x420] sm:$0xff]
    %v262 = vld [vmem:[#allocation5 + $0x428] sm:$0xf]
    %v263 = vld [vmem:[#allocation5 + $0x42c] sm:$0xff]
    %v264 = vld [vmem:[#allocation5 + $0x434] sm:$0xf]
    %v265 = vld [vmem:[#allocation5 + $0x438] sm:$0xff]
    %v266 = vld [vmem:[#allocation5 + $0x440] sm:$0xf]
    %v267 = vld [vmem:[#allocation5 + $0x444] sm:$0xff]
    %v268 = vld [vmem:[#allocation5 + $0x44c] sm:$0xf]
    %v269 = vld [vmem:[#allocation5 + $0x450] sm:$0xff]
    %v270 = vld [vmem:[#allocation5 + $0x458] sm:$0xf]
    %v271 = vld [vmem:[#allocation5 + $0x45c] sm:$0xff]
    %v272 = vld [vmem:[#allocation5 + $0x464] sm:$0xf]
    %v273 = vld [vmem:[#allocation5 + $0x468] sm:$0xff]
    %v274 = vld [vmem:[#allocation5 + $0x470] sm:$0xf]
    %v275 = vld [vmem:[#allocation5 + $0x474] sm:$0xff]
    %v276 = vld [vmem:[#allocation5 + $0x47c] sm:$0xf]
    %v277 = vld [vmem:[#allocation5 + $0x480] sm:$0xff]
    %v278 = vld [vmem:[#allocation5 + $0x488] sm:$0xf]
    %v279 = vld [vmem:[#allocation5 + $0x48c] sm:$0xff]
    %v280 = vld [vmem:[#allocation5 + $0x494] sm:$0xf]
    %v281 = vld [vmem:[%s2] sm:$0x7]
    %v282 = vunpack.c.l.bf16 %v281
    %v284 = vlaneseq
    %v285 = vshrl.u32 %v284, 7
    %v286 = vsub.s32 0, %v285
    %v287 = vrot.slane %v282, %v286
    %v288 = vlaneseq
    %v289 = vshrl.u32 %v288, 7
    %v290 = vsub.s32 2, %v289
    %v291 = vrot.slane %v282, %v290
    %v292 = vlaneseq
    %v293 = vshrl.u32 %v292, 7
    %v294 = vsub.s32 4, %v293
    %v295 = vrot.slane %v282, %v294
    %v299 = vlaneseq
    %v300 = vshrl.u32 %v299, 7
    %v301 = vsub.s32 0, %v300
    %v302 = vrot.slane %v287, %v301
    %v303 = vlaneseq
    %v304 = vshrl.u32 %v303, 7
    %v305 = vsub.s32 0, %v304
    %v306 = vrot.slane %v291, %v305
    %v307 = vlaneseq
    %v308 = vshrl.u32 %v307, 7
    %v309 = vsub.s32 0, %v308
    %v310 = vrot.slane %v295, %v309
    %v315 = vunpack.c.l.b16 %v81
    %v316 = vunpack.c.h.b16 %v81
    %v317 = vunpack.c.l.b16 %v82
    %v318 = vunpack.c.h.b16 %v82
    %v319 = vunpack.c.l.b16 %v83
    %v320 = vunpack.c.h.b16 %v83
    %v321 = vunpack.c.l.b16 %v84
    %v322 = vpack.c.b16 %v315, %v315
    %v323 = vpack.c.b16 %v316, %v316
    %v324 = vpack.c.b16 %v317, %v317
    %v325 = vpack.c.b16 %v318, %v318
    %v326 = vpack.c.b16 %v319, %v319
    %v327 = vpack.c.b16 %v320, %v320
    %v328 = vpack.c.b16 %v321, %v321
    %v531 = vunpack.c.l.b16 %v85
    %v532 = vunpack.c.h.b16 %v85
    %v533 = vunpack.c.l.b16 %v86
    %v534 = vunpack.c.l.b16 %v87
    %v535 = vunpack.c.h.b16 %v87
    %v536 = vunpack.c.l.b16 %v88
    %v537 = vunpack.c.l.b16 %v89
    %v538 = vunpack.c.h.b16 %v89
    %v539 = vunpack.c.l.b16 %v90
    %v540 = vunpack.c.l.b16 %v91
    %v541 = vunpack.c.h.b16 %v91
    %v542 = vunpack.c.l.b16 %v92
    %v543 = vunpack.c.l.b16 %v93
    %v544 = vunpack.c.h.b16 %v93
    %v545 = vunpack.c.l.b16 %v94
    %v546 = vunpack.c.l.b16 %v95
    %v547 = vunpack.c.h.b16 %v95
    %v548 = vunpack.c.l.b16 %v96
    %v549 = vunpack.c.l.b16 %v97
    %v550 = vunpack.c.h.b16 %v97
    %v551 = vunpack.c.l.b16 %v98
    %v552 = vunpack.c.l.b16 %v99
    %v553 = vunpack.c.h.b16 %v99
    %v554 = vunpack.c.l.b16 %v100
    %v555 = vunpack.c.l.b16 %v101
    %v556 = vunpack.c.h.b16 %v101
    %v557 = vunpack.c.l.b16 %v102
    %v558 = vunpack.c.l.b16 %v103
    %v559 = vunpack.c.h.b16 %v103
    %v560 = vunpack.c.l.b16 %v104
    %v561 = vunpack.c.l.b16 %v105
    %v562 = vunpack.c.h.b16 %v105
    %v563 = vunpack.c.l.b16 %v106
    %v564 = vunpack.c.l.b16 %v107
    %v565 = vunpack.c.h.b16 %v107
    %v566 = vunpack.c.l.b16 %v108
    %v567 = vunpack.c.l.b16 %v109
    %v568 = vunpack.c.h.b16 %v109
    %v569 = vunpack.c.l.b16 %v110
    %v570 = vunpack.c.l.b16 %v111
    %v571 = vunpack.c.h.b16 %v111
    %v572 = vunpack.c.l.b16 %v112
    %v573 = vunpack.c.l.b16 %v113
    %v574 = vunpack.c.h.b16 %v113
    %v575 = vunpack.c.l.b16 %v114
    %v576 = vunpack.c.l.b16 %v115
    %v577 = vunpack.c.h.b16 %v115
    %v578 = vunpack.c.l.b16 %v116
    %v579 = vunpack.c.l.b16 %v117
    %v580 = vunpack.c.h.b16 %v117
    %v581 = vunpack.c.l.b16 %v118
    %v582 = vunpack.c.l.b16 %v119
    %v583 = vunpack.c.h.b16 %v119
    %v584 = vunpack.c.l.b16 %v120
    %v585 = vunpack.c.l.b16 %v121
    %v586 = vunpack.c.h.b16 %v121
    %v587 = vunpack.c.l.b16 %v122
    %v588 = vunpack.c.l.b16 %v123
    %v589 = vunpack.c.h.b16 %v123
    %v590 = vunpack.c.l.b16 %v124
    %v591 = vunpack.c.l.b16 %v125
    %v592 = vunpack.c.h.b16 %v125
    %v593 = vunpack.c.l.b16 %v126
    %v594 = vunpack.c.l.b16 %v127
    %v595 = vunpack.c.h.b16 %v127
    %v596 = vunpack.c.l.b16 %v128
    %v597 = vunpack.c.l.b16 %v129
    %v598 = vunpack.c.h.b16 %v129
    %v599 = vunpack.c.l.b16 %v130
    %v600 = vunpack.c.l.b16 %v131
    %v601 = vunpack.c.h.b16 %v131
    %v602 = vunpack.c.l.b16 %v132
    %v603 = vunpack.c.l.b16 %v133
    %v604 = vunpack.c.h.b16 %v133
    %v605 = vunpack.c.l.b16 %v134
    %v606 = vunpack.c.l.b16 %v135
    %v607 = vunpack.c.h.b16 %v135
    %v608 = vunpack.c.l.b16 %v136
    %v609 = vunpack.c.l.b16 %v137
    %v610 = vunpack.c.h.b16 %v137
    %v611 = vunpack.c.l.b16 %v138
    %v612 = vunpack.c.l.b16 %v139
    %v613 = vunpack.c.h.b16 %v139
    %v614 = vunpack.c.l.b16 %v140
    %v615 = vunpack.c.l.b16 %v141
    %v616 = vunpack.c.h.b16 %v141
    %v617 = vunpack.c.l.b16 %v142
    %v618 = vunpack.c.l.b16 %v143
    %v619 = vunpack.c.h.b16 %v143
    %v620 = vunpack.c.l.b16 %v144
    %v621 = vunpack.c.l.b16 %v145
    %v622 = vunpack.c.h.b16 %v145
    %v623 = vunpack.c.l.b16 %v146
    %v624 = vunpack.c.l.b16 %v147
    %v625 = vunpack.c.h.b16 %v147
    %v626 = vunpack.c.l.b16 %v148
    %v627 = vunpack.c.l.b16 %v149
    %v628 = vunpack.c.h.b16 %v149
    %v629 = vunpack.c.l.b16 %v150
    %v630 = vunpack.c.l.b16 %v151
    %v631 = vunpack.c.h.b16 %v151
    %v632 = vunpack.c.l.b16 %v152
    %v633 = vunpack.c.l.b16 %v153
    %v634 = vunpack.c.h.b16 %v153
    %v635 = vunpack.c.l.b16 %v154
    %v636 = vunpack.c.l.b16 %v155
    %v637 = vunpack.c.h.b16 %v155
    %v638 = vunpack.c.l.b16 %v156
    %v639 = vunpack.c.l.b16 %v157
    %v640 = vunpack.c.h.b16 %v157
    %v641 = vunpack.c.l.b16 %v158
    %v642 = vunpack.c.l.b16 %v159
    %v643 = vunpack.c.h.b16 %v159
    %v644 = vunpack.c.l.b16 %v160
    %v645 = vunpack.c.l.b16 %v161
    %v646 = vunpack.c.h.b16 %v161
    %v647 = vunpack.c.l.b16 %v162
    %v648 = vunpack.c.l.b16 %v163
    %v649 = vunpack.c.h.b16 %v163
    %v650 = vunpack.c.l.b16 %v164
    %v651 = vunpack.c.l.b16 %v165
    %v652 = vunpack.c.h.b16 %v165
    %v653 = vunpack.c.l.b16 %v166
    %v654 = vunpack.c.l.b16 %v167
    %v655 = vunpack.c.h.b16 %v167
    %v656 = vunpack.c.l.b16 %v168
    %v657 = vunpack.c.l.b16 %v169
    %v658 = vunpack.c.h.b16 %v169
    %v659 = vunpack.c.l.b16 %v170
    %v660 = vunpack.c.l.b16 %v171
    %v661 = vunpack.c.h.b16 %v171
    %v662 = vunpack.c.l.b16 %v172
    %v663 = vunpack.c.l.b16 %v173
    %v664 = vunpack.c.h.b16 %v173
    %v665 = vunpack.c.l.b16 %v174
    %v666 = vunpack.c.l.b16 %v175
    %v667 = vunpack.c.h.b16 %v175
    %v668 = vunpack.c.l.b16 %v176
    %v669 = vunpack.c.l.b16 %v177
    %v670 = vunpack.c.h.b16 %v177
    %v671 = vunpack.c.l.b16 %v178
    %v672 = vunpack.c.l.b16 %v179
    %v673 = vunpack.c.h.b16 %v179
    %v674 = vunpack.c.l.b16 %v180
    %v675 = vunpack.c.l.b16 %v181
    %v676 = vunpack.c.h.b16 %v181
    %v677 = vunpack.c.l.b16 %v182
    %v678 = vunpack.c.l.b16 %v183
    %v679 = vunpack.c.h.b16 %v183
    %v680 = vunpack.c.l.b16 %v184
    %v681 = vunpack.c.l.b16 %v185
    %v682 = vunpack.c.h.b16 %v185
    %v683 = vunpack.c.l.b16 %v186
    %v684 = vunpack.c.l.b16 %v187
    %v685 = vunpack.c.h.b16 %v187
    %v686 = vunpack.c.l.b16 %v188
    %v687 = vunpack.c.l.b16 %v189
    %v688 = vunpack.c.h.b16 %v189
    %v689 = vunpack.c.l.b16 %v190
    %v690 = vunpack.c.l.b16 %v191
    %v691 = vunpack.c.h.b16 %v191
    %v692 = vunpack.c.l.b16 %v192
    %v693 = vunpack.c.l.b16 %v193
    %v694 = vunpack.c.h.b16 %v193
    %v695 = vunpack.c.l.b16 %v194
    %v696 = vunpack.c.l.b16 %v195
    %v697 = vunpack.c.h.b16 %v195
    %v698 = vunpack.c.l.b16 %v196
    %v699 = vunpack.c.l.b16 %v197
    %v700 = vunpack.c.h.b16 %v197
    %v701 = vunpack.c.l.b16 %v198
    %v702 = vunpack.c.l.b16 %v199
    %v703 = vunpack.c.h.b16 %v199
    %v704 = vunpack.c.l.b16 %v200
    %v705 = vunpack.c.l.b16 %v201
    %v706 = vunpack.c.h.b16 %v201
    %v707 = vunpack.c.l.b16 %v202
    %v708 = vunpack.c.l.b16 %v203
    %v709 = vunpack.c.h.b16 %v203
    %v710 = vunpack.c.l.b16 %v204
    %v711 = vunpack.c.l.b16 %v205
    %v712 = vunpack.c.h.b16 %v205
    %v713 = vunpack.c.l.b16 %v206
    %v714 = vunpack.c.l.b16 %v207
    %v715 = vunpack.c.h.b16 %v207
    %v716 = vunpack.c.l.b16 %v208
    %v717 = vunpack.c.l.b16 %v209
    %v718 = vunpack.c.h.b16 %v209
    %v719 = vunpack.c.l.b16 %v210
    %v720 = vunpack.c.l.b16 %v211
    %v721 = vunpack.c.h.b16 %v211
    %v722 = vunpack.c.l.b16 %v212
    %v723 = vunpack.c.l.b16 %v213
    %v724 = vunpack.c.h.b16 %v213
    %v725 = vunpack.c.l.b16 %v214
    %v726 = vunpack.c.l.b16 %v215
    %v727 = vunpack.c.h.b16 %v215
    %v728 = vunpack.c.l.b16 %v216
    %v729 = vunpack.c.l.b16 %v217
    %v730 = vunpack.c.h.b16 %v217
    %v731 = vunpack.c.l.b16 %v218
    %v732 = vunpack.c.l.b16 %v219
    %v733 = vunpack.c.h.b16 %v219
    %v734 = vunpack.c.l.b16 %v220
    %v735 = vunpack.c.l.b16 %v221
    %v736 = vunpack.c.h.b16 %v221
    %v737 = vunpack.c.l.b16 %v222
    %v738 = vunpack.c.l.b16 %v223
    %v739 = vunpack.c.h.b16 %v223
    %v740 = vunpack.c.l.b16 %v224
    %v741 = vunpack.c.l.b16 %v225
    %v742 = vunpack.c.h.b16 %v225
    %v743 = vunpack.c.l.b16 %v226
    %v744 = vunpack.c.l.b16 %v227
    %v745 = vunpack.c.h.b16 %v227
    %v746 = vunpack.c.l.b16 %v228
    %v747 = vunpack.c.l.b16 %v229
    %v748 = vunpack.c.h.b16 %v229
    %v749 = vunpack.c.l.b16 %v230
    %v750 = vunpack.c.l.b16 %v231
    %v751 = vunpack.c.h.b16 %v231
    %v752 = vunpack.c.l.b16 %v232
    %v753 = vunpack.c.l.b16 %v233
    %v754 = vunpack.c.h.b16 %v233
    %v755 = vunpack.c.l.b16 %v234
    %v756 = vunpack.c.l.b16 %v235
    %v757 = vunpack.c.h.b16 %v235
    %v758 = vunpack.c.l.b16 %v236
    %v759 = vunpack.c.l.b16 %v237
    %v760 = vunpack.c.h.b16 %v237
    %v761 = vunpack.c.l.b16 %v238
    %v762 = vunpack.c.l.b16 %v239
    %v763 = vunpack.c.h.b16 %v239
    %v764 = vunpack.c.l.b16 %v240
    %v765 = vunpack.c.l.b16 %v241
    %v766 = vunpack.c.h.b16 %v241
    %v767 = vunpack.c.l.b16 %v242
    %v768 = vunpack.c.l.b16 %v243
    %v769 = vunpack.c.h.b16 %v243
    %v770 = vunpack.c.l.b16 %v244
    %v771 = vunpack.c.l.b16 %v245
    %v772 = vunpack.c.h.b16 %v245
    %v773 = vunpack.c.l.b16 %v246
    %v774 = vunpack.c.l.b16 %v247
    %v775 = vunpack.c.h.b16 %v247
    %v776 = vunpack.c.l.b16 %v248
    %v777 = vunpack.c.l.b16 %v249
    %v778 = vunpack.c.h.b16 %v249
    %v779 = vunpack.c.l.b16 %v250
    %v780 = vunpack.c.l.b16 %v251
    %v781 = vunpack.c.h.b16 %v251
    %v782 = vunpack.c.l.b16 %v252
    %v783 = vunpack.c.l.b16 %v253
    %v784 = vunpack.c.h.b16 %v253
    %v785 = vunpack.c.l.b16 %v254
    %v786 = vunpack.c.l.b16 %v255
    %v787 = vunpack.c.h.b16 %v255
    %v788 = vunpack.c.l.b16 %v256
    %v789 = vunpack.c.l.b16 %v257
    %v790 = vunpack.c.h.b16 %v257
    %v791 = vunpack.c.l.b16 %v258
    %v792 = vunpack.c.l.b16 %v259
    %v793 = vunpack.c.h.b16 %v259
    %v794 = vunpack.c.l.b16 %v260
    %v795 = vunpack.c.l.b16 %v261
    %v796 = vunpack.c.h.b16 %v261
    %v797 = vunpack.c.l.b16 %v262
    %v798 = vunpack.c.l.b16 %v263
    %v799 = vunpack.c.h.b16 %v263
    %v800 = vunpack.c.l.b16 %v264
    %v801 = vunpack.c.l.b16 %v265
    %v802 = vunpack.c.h.b16 %v265
    %v803 = vunpack.c.l.b16 %v266
    %v804 = vunpack.c.l.b16 %v267
    %v805 = vunpack.c.h.b16 %v267
    %v806 = vunpack.c.l.b16 %v268
    %v807 = vunpack.c.l.b16 %v269
    %v808 = vunpack.c.h.b16 %v269
    %v809 = vunpack.c.l.b16 %v270
    %v810 = vunpack.c.l.b16 %v271
    %v811 = vunpack.c.h.b16 %v271
    %v812 = vunpack.c.l.b16 %v272
    %v813 = vunpack.c.l.b16 %v273
    %v814 = vunpack.c.h.b16 %v273
    %v815 = vunpack.c.l.b16 %v274
    %v816 = vunpack.c.l.b16 %v275
    %v817 = vunpack.c.h.b16 %v275
    %v818 = vunpack.c.l.b16 %v276
    %v819 = vunpack.c.l.b16 %v277
    %v820 = vunpack.c.h.b16 %v277
    %v821 = vunpack.c.l.b16 %v278
    %v822 = vunpack.c.l.b16 %v279
    %v823 = vunpack.c.h.b16 %v279
    %v824 = vunpack.c.l.b16 %v280
    %v825 = vpack.c.b16 %v534, %v531
    %v826 = vpack.c.b16 %v535, %v532
    %v827 = vpack.c.b16 %v536, %v533
    %v828 = vpack.c.b16 %v540, %v537
    %v829 = vpack.c.b16 %v541, %v538
    %v830 = vpack.c.b16 %v542, %v539
    %v831 = vpack.c.b16 %v546, %v543
    %v832 = vpack.c.b16 %v547, %v544
    %v833 = vpack.c.b16 %v548, %v545
    %v834 = vpack.c.b16 %v552, %v549
    %v835 = vpack.c.b16 %v553, %v550
    %v836 = vpack.c.b16 %v554, %v551
    %v837 = vpack.c.b16 %v558, %v555
    %v838 = vpack.c.b16 %v559, %v556
    %v839 = vpack.c.b16 %v560, %v557
    %v840 = vpack.c.b16 %v564, %v561
    %v841 = vpack.c.b16 %v565, %v562
    %v842 = vpack.c.b16 %v566, %v563
    %v843 = vpack.c.b16 %v570, %v567
    %v844 = vpack.c.b16 %v571, %v568
    %v845 = vpack.c.b16 %v572, %v569
    %v846 = vpack.c.b16 %v576, %v573
    %v847 = vpack.c.b16 %v577, %v574
    %v848 = vpack.c.b16 %v578, %v575
    %v849 = vpack.c.b16 %v582, %v579
    %v850 = vpack.c.b16 %v583, %v580
    %v851 = vpack.c.b16 %v584, %v581
    %v852 = vpack.c.b16 %v588, %v585
    %v853 = vpack.c.b16 %v589, %v586
    %v854 = vpack.c.b16 %v590, %v587
    %v855 = vpack.c.b16 %v594, %v591
    %v856 = vpack.c.b16 %v595, %v592
    %v857 = vpack.c.b16 %v596, %v593
    %v858 = vpack.c.b16 %v600, %v597
    %v859 = vpack.c.b16 %v601, %v598
    %v860 = vpack.c.b16 %v602, %v599
    %v861 = vpack.c.b16 %v606, %v603
    %v862 = vpack.c.b16 %v607, %v604
    %v863 = vpack.c.b16 %v608, %v605
    %v864 = vpack.c.b16 %v612, %v609
    %v865 = vpack.c.b16 %v613, %v610
    %v866 = vpack.c.b16 %v614, %v611
    %v867 = vpack.c.b16 %v618, %v615
    %v868 = vpack.c.b16 %v619, %v616
    %v869 = vpack.c.b16 %v620, %v617
    %v870 = vpack.c.b16 %v624, %v621
    %v871 = vpack.c.b16 %v625, %v622
    %v872 = vpack.c.b16 %v626, %v623
    %v873 = vpack.c.b16 %v630, %v627
    %v874 = vpack.c.b16 %v631, %v628
    %v875 = vpack.c.b16 %v632, %v629
    %v876 = vpack.c.b16 %v636, %v633
    %v877 = vpack.c.b16 %v637, %v634
    %v878 = vpack.c.b16 %v638, %v635
    %v879 = vpack.c.b16 %v642, %v639
    %v880 = vpack.c.b16 %v643, %v640
    %v881 = vpack.c.b16 %v644, %v641
    %v882 = vpack.c.b16 %v648, %v645
    %v883 = vpack.c.b16 %v649, %v646
    %v884 = vpack.c.b16 %v650, %v647
    %v885 = vpack.c.b16 %v654, %v651
    %v886 = vpack.c.b16 %v655, %v652
    %v887 = vpack.c.b16 %v656, %v653
    %v888 = vpack.c.b16 %v660, %v657
    %v889 = vpack.c.b16 %v661, %v658
    %v890 = vpack.c.b16 %v662, %v659
    %v891 = vpack.c.b16 %v666, %v663
    %v892 = vpack.c.b16 %v667, %v664
    %v893 = vpack.c.b16 %v668, %v665
    %v894 = vpack.c.b16 %v672, %v669
    %v895 = vpack.c.b16 %v673, %v670
    %v896 = vpack.c.b16 %v674, %v671
    %v897 = vpack.c.b16 %v678, %v675
    %v898 = vpack.c.b16 %v679, %v676
    %v899 = vpack.c.b16 %v680, %v677
    %v900 = vpack.c.b16 %v684, %v681
    %v901 = vpack.c.b16 %v685, %v682
    %v902 = vpack.c.b16 %v686, %v683
    %v903 = vpack.c.b16 %v690, %v687
    %v904 = vpack.c.b16 %v691, %v688
    %v905 = vpack.c.b16 %v692, %v689
    %v906 = vpack.c.b16 %v696, %v693
    %v907 = vpack.c.b16 %v697, %v694
    %v908 = vpack.c.b16 %v698, %v695
    %v909 = vpack.c.b16 %v702, %v699
    %v910 = vpack.c.b16 %v703, %v700
    %v911 = vpack.c.b16 %v704, %v701
    %v912 = vpack.c.b16 %v708, %v705
    %v913 = vpack.c.b16 %v709, %v706
    %v914 = vpack.c.b16 %v710, %v707
    %v915 = vpack.c.b16 %v714, %v711
    %v916 = vpack.c.b16 %v715, %v712
    %v917 = vpack.c.b16 %v716, %v713
    %v918 = vpack.c.b16 %v720, %v717
    %v919 = vpack.c.b16 %v721, %v718
    %v920 = vpack.c.b16 %v722, %v719
    %v921 = vpack.c.b16 %v726, %v723
    %v922 = vpack.c.b16 %v727, %v724
    %v923 = vpack.c.b16 %v728, %v725
    %v924 = vpack.c.b16 %v732, %v729
    %v925 = vpack.c.b16 %v733, %v730
    %v926 = vpack.c.b16 %v734, %v731
    %v927 = vpack.c.b16 %v738, %v735
    %v928 = vpack.c.b16 %v739, %v736
    %v929 = vpack.c.b16 %v740, %v737
    %v930 = vpack.c.b16 %v744, %v741
    %v931 = vpack.c.b16 %v745, %v742
    %v932 = vpack.c.b16 %v746, %v743
    %v933 = vpack.c.b16 %v750, %v747
    %v934 = vpack.c.b16 %v751, %v748
    %v935 = vpack.c.b16 %v752, %v749
    %v936 = vpack.c.b16 %v756, %v753
    %v937 = vpack.c.b16 %v757, %v754
    %v938 = vpack.c.b16 %v758, %v755
    %v939 = vpack.c.b16 %v762, %v759
    %v940 = vpack.c.b16 %v763, %v760
    %v941 = vpack.c.b16 %v764, %v761
    %v942 = vpack.c.b16 %v768, %v765
    %v943 = vpack.c.b16 %v769, %v766
    %v944 = vpack.c.b16 %v770, %v767
    %v945 = vpack.c.b16 %v774, %v771
    %v946 = vpack.c.b16 %v775, %v772
    %v947 = vpack.c.b16 %v776, %v773
    %v948 = vpack.c.b16 %v780, %v777
    %v949 = vpack.c.b16 %v781, %v778
    %v950 = vpack.c.b16 %v782, %v779
    %v951 = vpack.c.b16 %v786, %v783
    %v952 = vpack.c.b16 %v787, %v784
    %v953 = vpack.c.b16 %v788, %v785
    %v954 = vpack.c.b16 %v792, %v789
    %v955 = vpack.c.b16 %v793, %v790
    %v956 = vpack.c.b16 %v794, %v791
    %v957 = vpack.c.b16 %v798, %v795
    %v958 = vpack.c.b16 %v799, %v796
    %v959 = vpack.c.b16 %v800, %v797
    %v960 = vpack.c.b16 %v804, %v801
    %v961 = vpack.c.b16 %v805, %v802
    %v962 = vpack.c.b16 %v806, %v803
    %v963 = vpack.c.b16 %v810, %v807
    %v964 = vpack.c.b16 %v811, %v808
    %v965 = vpack.c.b16 %v812, %v809
    %v966 = vpack.c.b16 %v816, %v813
    %v967 = vpack.c.b16 %v817, %v814
    %v968 = vpack.c.b16 %v818, %v815
    %v969 = vpack.c.b16 %v822, %v819
    %v970 = vpack.c.b16 %v823, %v820
    %v971 = vpack.c.b16 %v824, %v821
    %vm1119 = vcmask 130048
    %v1121 = vsel %vm1119, %v328, 0
    %1123 = vmatprep.subr.bf16.mxu0 %v826
    %1124 = vmatpush1.bf16.msra.mxu0 %v825
    %1125 = vmatprep.subr.bf16.mxu0 %v829
    %1126 = vmatpush1.bf16.msra.mxu0 %v828
    %1127 = vmatprep.subr.bf16.mxu0 %v832
    %1128 = vmatpush1.bf16.msra.mxu0 %v831
    %1129 = vmatprep.subr.bf16.mxu0 %v835
    %1130 = vmatpush1.bf16.msra.mxu0 %v834
    %1131 = vmatprep.subr.bf16.mxu0 %v838
    %1132 = vmatpush1.bf16.msra.mxu0 %v837
    %1133 = vmatprep.subr.bf16.mxu0 %v841
    %1134 = vmatpush1.bf16.msra.mxu0 %v840
    %1135 = vmatprep.subr.bf16.mxu0 %v844
    %1136 = vmatpush1.bf16.msra.mxu0 %v843
    %1137 = vmatprep.subr.bf16.mxu0 %v847
    %1138 = vmatpush1.bf16.msra.mxu0 %v846
    %1139 = vmatprep.subr.bf16.mxu0 %v850
    %1140 = vmatpush1.bf16.msra.mxu0 %v849
    %1141 = vmatprep.subr.bf16.mxu0 %v853
    %1142 = vmatpush1.bf16.msra.mxu0 %v852
    %1143 = vmatprep.subr.bf16.mxu0 %v856
    %1144 = vmatpush1.bf16.msra.mxu0 %v855
    %1145 = vmatprep.subr.bf16.mxu0 %v859
    %1146 = vmatpush1.bf16.msra.mxu0 %v858
    %1147 = vmatprep.subr.bf16.mxu0 %v862
    %1148 = vmatpush1.bf16.msra.mxu0 %v861
    %1149 = vmatprep.subr.bf16.mxu0 %v865
    %1150 = vmatpush1.bf16.msra.mxu0 %v864
    %1151 = vmatprep.subr.bf16.mxu0 %v868
    %1152 = vmatpush1.bf16.msra.mxu0 %v867
    %1153 = vmatprep.subr.bf16.mxu0 %v871
    %1154 = vmatpush1.bf16.msra.mxu0 %v870
    %1155 = vmatprep.mubr.bf16.mxu0 %v323
    %1156 = vmatmul.mubr.bf16.gmra.mrb[0].mxu0 %v322
    %v1157 = vpop.f32.mrb[0].mxu0
    %v1158 = vadd.f32 %v302, %v1157
    %v1159 = vpop.f32.mrb[0].mxu0
    %v1160 = vadd.f32 %v306, %v1159
    %v1161 = vpop.f32.mrb[0].mxu0
    %v1162 = vpop.f32.mrb[0].mxu0
    %1163 = vdwg.mxu0
    %1164 = vmatprep.subr.bf16.mxu0 %v874
    %1165 = vmatpush1.bf16.msra.mxu0 %v873
    %1166 = vmatprep.subr.bf16.mxu0 %v877
    %1167 = vmatpush1.bf16.msra.mxu0 %v876
    %1168 = vmatprep.subr.bf16.mxu0 %v880
    %1169 = vmatpush1.bf16.msra.mxu0 %v879
    %1170 = vmatprep.subr.bf16.mxu0 %v883
    %1171 = vmatpush1.bf16.msra.mxu0 %v882
    %1172 = vmatprep.subr.bf16.mxu0 %v886
    %1173 = vmatpush1.bf16.msra.mxu0 %v885
    %1174 = vmatprep.subr.bf16.mxu0 %v889
    %1175 = vmatpush1.bf16.msra.mxu0 %v888
    %1176 = vmatprep.subr.bf16.mxu0 %v892
    %1177 = vmatpush1.bf16.msra.mxu0 %v891
    %1178 = vmatprep.subr.bf16.mxu0 %v895
    %1179 = vmatpush1.bf16.msra.mxu0 %v894
    %1180 = vmatprep.subr.bf16.mxu0 %v898
    %1181 = vmatpush1.bf16.msra.mxu0 %v897
    %1182 = vmatprep.subr.bf16.mxu0 %v901
    %1183 = vmatpush1.bf16.msra.mxu0 %v900
    %1184 = vmatprep.subr.bf16.mxu0 %v904
    %1185 = vmatpush1.bf16.msra.mxu0 %v903
    %1186 = vmatprep.subr.bf16.mxu0 %v907
    %1187 = vmatpush1.bf16.msra.mxu0 %v906
    %1188 = vmatprep.subr.bf16.mxu0 %v910
    %1189 = vmatpush1.bf16.msra.mxu0 %v909
    %1190 = vmatprep.subr.bf16.mxu0 %v913
    %1191 = vmatpush1.bf16.msra.mxu0 %v912
    %1192 = vmatprep.subr.bf16.mxu0 %v916
    %1193 = vmatpush1.bf16.msra.mxu0 %v915
    %1194 = vmatprep.subr.bf16.mxu0 %v919
    %1195 = vmatpush1.bf16.msra.mxu0 %v918
    %1196 = vmatprep.mubr.bf16.mxu0 %v325
    %1197 = vmatmul.mubr.bf16.gmra.mrb[0].mxu0 %v324
    %v1198 = vpop.f32.mrb[0].mxu0
    %v1199 = vadd.f32 %v1158, %v1198
    %v1200 = vpop.f32.mrb[0].mxu0
    %v1201 = vadd.f32 %v1160, %v1200
    %v1202 = vpop.f32.mrb[0].mxu0
    %v1203 = vpop.f32.mrb[0].mxu0
    %1204 = vdwg.mxu0
    %1205 = vmatprep.subr.bf16.mxu0 %v922
    %1206 = vmatpush1.bf16.msra.mxu0 %v921
    %1207 = vmatprep.subr.bf16.mxu0 %v925
    %1208 = vmatpush1.bf16.msra.mxu0 %v924
    %1209 = vmatprep.subr.bf16.mxu0 %v928
    %1210 = vmatpush1.bf16.msra.mxu0 %v927
    %1211 = vmatprep.subr.bf16.mxu0 %v931
    %1212 = vmatpush1.bf16.msra.mxu0 %v930
    %1213 = vmatprep.subr.bf16.mxu0 %v934
    %1214 = vmatpush1.bf16.msra.mxu0 %v933
    %1215 = vmatprep.subr.bf16.mxu0 %v937
    %1216 = vmatpush1.bf16.msra.mxu0 %v936
    %1217 = vmatprep.subr.bf16.mxu0 %v940
    %1218 = vmatpush1.bf16.msra.mxu0 %v939
    %1219 = vmatprep.subr.bf16.mxu0 %v943
    %1220 = vmatpush1.bf16.msra.mxu0 %v942
    %1221 = vmatprep.subr.bf16.mxu0 %v946
    %1222 = vmatpush1.bf16.msra.mxu0 %v945
    %1223 = vmatprep.subr.bf16.mxu0 %v949
    %1224 = vmatpush1.bf16.msra.mxu0 %v948
    %1225 = vmatprep.subr.bf16.mxu0 %v952
    %1226 = vmatpush1.bf16.msra.mxu0 %v951
    %1227 = vmatprep.subr.bf16.mxu0 %v955
    %1228 = vmatpush1.bf16.msra.mxu0 %v954
    %1229 = vmatprep.subr.bf16.mxu0 %v958
    %1230 = vmatpush1.bf16.msra.mxu0 %v957
    %1231 = vmatprep.subr.bf16.mxu0 %v961
    %1232 = vmatpush1.bf16.msra.mxu0 %v960
    %1233 = vmatprep.subr.bf16.mxu0 %v964
    %1234 = vmatpush1.bf16.msra.mxu0 %v963
    %1235 = vmatprep.subr.bf16.mxu0 %v967
    %1236 = vmatpush1.bf16.msra.mxu0 %v966
    %1237 = vmatprep.mubr.bf16.mxu0 %v327
    %1238 = vmatmul.mubr.bf16.gmra.mrb[0].mxu0 %v326
    %v1239 = vpop.f32.mrb[0].mxu0
    %v1240 = vadd.f32 %v1199, %v1239
    %v1241 = vpop.f32.mrb[0].mxu0
    %v1242 = vadd.f32 %v1201, %v1241
    %v1243 = vpop.f32.mrb[0].mxu0
    %v1244 = vpop.f32.mrb[0].mxu0
    %1245 = vdwg.mxu0
    %1246 = vmatprep.subr.bf16.mxu0 %v970
    %1247 = vmatpush1.bf16.msra.mxu0 %v969
    %1248 = vmatprep.subr.bf16.mxu0 0
    %1249 = vmatpush1.bf16.msra.mxu0 0
    %1250 = vmatprep.subr.bf16.mxu0 0
    %1251 = vmatpush1.bf16.msra.mxu0 0
    %1252 = vmatprep.subr.bf16.mxu0 0
    %1253 = vmatpush1.bf16.msra.mxu0 0
    %1254 = vmatprep.subr.bf16.mxu0 0
    %1255 = vmatpush1.bf16.msra.mxu0 0
    %1256 = vmatprep.subr.bf16.mxu0 0
    %1257 = vmatpush1.bf16.msra.mxu0 0
    %1258 = vmatprep.subr.bf16.mxu0 0
    %1259 = vmatpush1.bf16.msra.mxu0 0
    %1260 = vmatprep.subr.bf16.mxu0 0
    %1261 = vmatpush1.bf16.msra.mxu0 0
    %1262 = vmatprep.subr.bf16.mxu0 0
    %1263 = vmatpush1.bf16.msra.mxu0 0
    %1264 = vmatprep.subr.bf16.mxu0 0
    %1265 = vmatpush1.bf16.msra.mxu0 0
    %1266 = vmatprep.subr.bf16.mxu0 0
    %1267 = vmatpush1.bf16.msra.mxu0 0
    %1268 = vmatprep.subr.bf16.mxu0 0
    %1269 = vmatpush1.bf16.msra.mxu0 0
    %1270 = vmatprep.subr.bf16.mxu0 0
    %1271 = vmatpush1.bf16.msra.mxu0 0
    %1272 = vmatprep.subr.bf16.mxu0 0
    %1273 = vmatpush1.bf16.msra.mxu0 0
    %1274 = vmatprep.subr.bf16.mxu0 0
    %1275 = vmatpush1.bf16.msra.mxu0 0
    %1276 = vmatprep.subr.bf16.mxu0 0
    %1277 = vmatpush1.bf16.msra.mxu0 0
    %1278 = vmatprep.mubr.bf16.mxu0 0
    %1279 = vmatmul.mubr.bf16.gmra.mrb[0].mxu0 %v1121
    %v1280 = vpop.f32.mrb[0].mxu0
    %v1281 = vadd.f32 %v1240, %v1280
    %v1282 = vpop.f32.mrb[0].mxu0
    %v1283 = vadd.f32 %v1242, %v1282
    %v1284 = vpop.f32.mrb[0].mxu0
    %v1285 = vpop.f32.mrb[0].mxu0
    %1286 = vdwg.mxu0
    %1287 = vmatprep.subr.bf16.mxu0 0
    %1288 = vmatpush1.bf16.msra.mxu0 %v827
    %1289 = vmatprep.subr.bf16.mxu0 0
    %1290 = vmatpush1.bf16.msra.mxu0 %v830
    %1291 = vmatprep.subr.bf16.mxu0 0
    %1292 = vmatpush1.bf16.msra.mxu0 %v833
    %1293 = vmatprep.subr.bf16.mxu0 0
    %1294 = vmatpush1.bf16.msra.mxu0 %v836
    %1295 = vmatprep.subr.bf16.mxu0 0
    %1296 = vmatpush1.bf16.msra.mxu0 %v839
    %1297 = vmatprep.subr.bf16.mxu0 0
    %1298 = vmatpush1.bf16.msra.mxu0 %v842
    %1299 = vmatprep.subr.bf16.mxu0 0
    %1300 = vmatpush1.bf16.msra.mxu0 %v845
    %1301 = vmatprep.subr.bf16.mxu0 0
    %1302 = vmatpush1.bf16.msra.mxu0 %v848
    %1303 = vmatprep.subr.bf16.mxu0 0
    %1304 = vmatpush1.bf16.msra.mxu0 %v851
    %1305 = vmatprep.subr.bf16.mxu0 0
    %1306 = vmatpush1.bf16.msra.mxu0 %v854
    %1307 = vmatprep.subr.bf16.mxu0 0
    %1308 = vmatpush1.bf16.msra.mxu0 %v857
    %1309 = vmatprep.subr.bf16.mxu0 0
    %1310 = vmatpush1.bf16.msra.mxu0 %v860
    %1311 = vmatprep.subr.bf16.mxu0 0
    %1312 = vmatpush1.bf16.msra.mxu0 %v863
    %1313 = vmatprep.subr.bf16.mxu0 0
    %1314 = vmatpush1.bf16.msra.mxu0 %v866
    %1315 = vmatprep.subr.bf16.mxu0 0
    %1316 = vmatpush1.bf16.msra.mxu0 %v869
    %1317 = vmatprep.subr.bf16.mxu0 0
    %1318 = vmatpush1.bf16.msra.mxu0 %v872
    %1319 = vmatprep.mubr.bf16.mxu0 %v323
    %1320 = vmatmul.mubr.bf16.gmra.mrb[0].mxu0 %v322
    %v1321 = vpop.f32.mrb[0].mxu0
    %v1322 = vadd.f32 %v310, %v1321
    %v1323 = vpop.f32.mrb[0].mxu0
    %v1324 = vpop.f32.mrb[0].mxu0
    %v1325 = vpop.f32.mrb[0].mxu0
    %1326 = vdwg.mxu0
    %1327 = vmatprep.subr.bf16.mxu0 0
    %1328 = vmatpush1.bf16.msra.mxu0 %v875
    %1329 = vmatprep.subr.bf16.mxu0 0
    %1330 = vmatpush1.bf16.msra.mxu0 %v878
    %1331 = vmatprep.subr.bf16.mxu0 0
    %1332 = vmatpush1.bf16.msra.mxu0 %v881
    %1333 = vmatprep.subr.bf16.mxu0 0
    %1334 = vmatpush1.bf16.msra.mxu0 %v884
    %1335 = vmatprep.subr.bf16.mxu0 0
    %1336 = vmatpush1.bf16.msra.mxu0 %v887
    %1337 = vmatprep.subr.bf16.mxu0 0
    %1338 = vmatpush1.bf16.msra.mxu0 %v890
    %1339 = vmatprep.subr.bf16.mxu0 0
    %1340 = vmatpush1.bf16.msra.mxu0 %v893
    %1341 = vmatprep.subr.bf16.mxu0 0
    %1342 = vmatpush1.bf16.msra.mxu0 %v896
    %1343 = vmatprep.subr.bf16.mxu0 0
    %1344 = vmatpush1.bf16.msra.mxu0 %v899
    %1345 = vmatprep.subr.bf16.mxu0 0
    %1346 = vmatpush1.bf16.msra.mxu0 %v902
    %1347 = vmatprep.subr.bf16.mxu0 0
    %1348 = vmatpush1.bf16.msra.mxu0 %v905
    %1349 = vmatprep.subr.bf16.mxu0 0
    %1350 = vmatpush1.bf16.msra.mxu0 %v908
    %1351 = vmatprep.subr.bf16.mxu0 0
    %1352 = vmatpush1.bf16.msra.mxu0 %v911
    %1353 = vmatprep.subr.bf16.mxu0 0
    %1354 = vmatpush1.bf16.msra.mxu0 %v914
    %1355 = vmatprep.subr.bf16.mxu0 0
    %1356 = vmatpush1.bf16.msra.mxu0 %v917
    %1357 = vmatprep.subr.bf16.mxu0 0
    %1358 = vmatpush1.bf16.msra.mxu0 %v920
    %1359 = vmatprep.mubr.bf16.mxu0 %v325
    %1360 = vmatmul.mubr.bf16.gmra.mrb[0].mxu0 %v324
    %v1361 = vpop.f32.mrb[0].mxu0
    %v1362 = vadd.f32 %v1322, %v1361
    %v1363 = vpop.f32.mrb[0].mxu0
    %v1364 = vpop.f32.mrb[0].mxu0
    %v1365 = vpop.f32.mrb[0].mxu0
    %1366 = vdwg.mxu0
    %1367 = vmatprep.subr.bf16.mxu0 0
    %1368 = vmatpush1.bf16.msra.mxu0 %v923
    %1369 = vmatprep.subr.bf16.mxu0 0
    %1370 = vmatpush1.bf16.msra.mxu0 %v926
    %1371 = vmatprep.subr.bf16.mxu0 0
    %1372 = vmatpush1.bf16.msra.mxu0 %v929
    %1373 = vmatprep.subr.bf16.mxu0 0
    %1374 = vmatpush1.bf16.msra.mxu0 %v932
    %1375 = vmatprep.subr.bf16.mxu0 0
    %1376 = vmatpush1.bf16.msra.mxu0 %v935
    %1377 = vmatprep.subr.bf16.mxu0 0
    %1378 = vmatpush1.bf16.msra.mxu0 %v938
    %1379 = vmatprep.subr.bf16.mxu0 0
    %1380 = vmatpush1.bf16.msra.mxu0 %v941
    %1381 = vmatprep.subr.bf16.mxu0 0
    %1382 = vmatpush1.bf16.msra.mxu0 %v944
    %1383 = vmatprep.subr.bf16.mxu0 0
    %1384 = vmatpush1.bf16.msra.mxu0 %v947
    %1385 = vmatprep.subr.bf16.mxu0 0
    %1386 = vmatpush1.bf16.msra.mxu0 %v950
    %1387 = vmatprep.subr.bf16.mxu0 0
    %1388 = vmatpush1.bf16.msra.mxu0 %v953
    %1389 = vmatprep.subr.bf16.mxu0 0
    %1390 = vmatpush1.bf16.msra.mxu0 %v956
    %1391 = vmatprep.subr.bf16.mxu0 0
    %1392 = vmatpush1.bf16.msra.mxu0 %v959
    %1393 = vmatprep.subr.bf16.mxu0 0
    %1394 = vmatpush1.bf16.msra.mxu0 %v962
    %1395 = vmatprep.subr.bf16.mxu0 0
    %1396 = vmatpush1.bf16.msra.mxu0 %v965
    %1397 = vmatprep.subr.bf16.mxu0 0
    %1398 = vmatpush1.bf16.msra.mxu0 %v968
    %1399 = vmatprep.mubr.bf16.mxu0 %v327
    %1400 = vmatmul.mubr.bf16.gmra.mrb[0].mxu0 %v326
    %v1401 = vpop.f32.mrb[0].mxu0
    %v1402 = vadd.f32 %v1362, %v1401
    %v1403 = vpop.f32.mrb[0].mxu0
    %v1404 = vpop.f32.mrb[0].mxu0
    %v1405 = vpop.f32.mrb[0].mxu0
    %1406 = vdwg.mxu0
    %1407 = vmatprep.subr.bf16.mxu0 0
    %1408 = vmatpush1.bf16.msra.mxu0 %v971
    %1409 = vmatprep.subr.bf16.mxu0 0
    %1410 = vmatpush1.bf16.msra.mxu0 0
    %1411 = vmatprep.subr.bf16.mxu0 0
    %1412 = vmatpush1.bf16.msra.mxu0 0
    %1413 = vmatprep.subr.bf16.mxu0 0
    %1414 = vmatpush1.bf16.msra.mxu0 0
    %1415 = vmatprep.subr.bf16.mxu0 0
    %1416 = vmatpush1.bf16.msra.mxu0 0
    %1417 = vmatprep.subr.bf16.mxu0 0
    %1418 = vmatpush1.bf16.msra.mxu0 0
    %1419 = vmatprep.subr.bf16.mxu0 0
    %1420 = vmatpush1.bf16.msra.mxu0 0
    %1421 = vmatprep.subr.bf16.mxu0 0
    %1422 = vmatpush1.bf16.msra.mxu0 0
    %1423 = vmatprep.subr.bf16.mxu0 0
    %1424 = vmatpush1.bf16.msra.mxu0 0
    %1425 = vmatprep.subr.bf16.mxu0 0
    %1426 = vmatpush1.bf16.msra.mxu0 0
    %1427 = vmatprep.subr.bf16.mxu0 0
    %1428 = vmatpush1.bf16.msra.mxu0 0
    %1429 = vmatprep.subr.bf16.mxu0 0
    %1430 = vmatpush1.bf16.msra.mxu0 0
    %1431 = vmatprep.subr.bf16.mxu0 0
    %1432 = vmatpush1.bf16.msra.mxu0 0
    %1433 = vmatprep.subr.bf16.mxu0 0
    %1434 = vmatpush1.bf16.msra.mxu0 0
    %1435 = vmatprep.subr.bf16.mxu0 0
    %1436 = vmatpush1.bf16.msra.mxu0 0
    %1437 = vmatprep.subr.bf16.mxu0 0
    %1438 = vmatpush1.bf16.msra.mxu0 0
    %1439 = vmatprep.mubr.bf16.mxu0 0
    %1440 = vmatmul.mubr.bf16.gmra.mrb[0].mxu0 %v1121
    %v1441 = vpop.f32.mrb[0].mxu0
    %v1442 = vadd.f32 %v1402, %v1441
    %v1443 = vpop.f32.mrb[0].mxu0
    %v1444 = vpop.f32.mrb[0].mxu0
    %v1445 = vpop.f32.mrb[0].mxu0
    %1446 = vdwg.mxu0
    %v1447 = vmax.f32 %v1281, 0.0
    %v1448 = vmax.f32 %v1283, 0.0
    %v1449 = vmax.f32 %v1442, 0.0
    %v1450 = vpack.c.bf16 %v1447, %v1447
    %v1451 = vpack.c.bf16 %v1448, %v1448
    %v1452 = vpack.c.bf16 %v1449, %v1449
    %v1453 = vld [vmem:[#allocation7] sm:$0xf]
    %v1454 = vld [vmem:[#allocation7 + $0x4] sm:$0xf]
    %v1455 = vld [vmem:[#allocation7 + $0x8] sm:$0xf]
    %v1456 = vld [vmem:[#allocation7 + $0xc] sm:$0xf]
    %v1457 = vld [vmem:[#allocation7 + $0x10] sm:$0xf]
    %v1458 = vld [vmem:[#allocation7 + $0x14] sm:$0xf]
    %v1459 = vld [vmem:[#allocation7 + $0x18] sm:$0xf]
    %v1460 = vld [vmem:[#allocation7 + $0x1c] sm:$0xf]
    %v1461 = vld [vmem:[#allocation7 + $0x20] sm:$0xf]
    %v1462 = vld [vmem:[#allocation7 + $0x24] sm:$0xf]
    %v1463 = vld [vmem:[#allocation7 + $0x28] sm:$0xf]
    %v1464 = vld [vmem:[#allocation7 + $0x2c] sm:$0xf]
    %v1465 = vld [vmem:[#allocation7 + $0x30] sm:$0xf]
    %v1466 = vld [vmem:[#allocation7 + $0x34] sm:$0xf]
    %v1467 = vld [vmem:[#allocation7 + $0x38] sm:$0xf]
    %v1468 = vld [vmem:[#allocation7 + $0x3c] sm:$0xf]
    %v1469 = vld [vmem:[#allocation7 + $0x40] sm:$0xf]
    %v1470 = vld [vmem:[#allocation7 + $0x44] sm:$0xf]
    %v1471 = vld [vmem:[#allocation7 + $0x48] sm:$0xf]
    %v1472 = vld [vmem:[#allocation7 + $0x4c] sm:$0xf]
    %v1473 = vld [vmem:[#allocation7 + $0x50] sm:$0xf]
    %v1474 = vld [vmem:[#allocation7 + $0x54] sm:$0xf]
    %v1475 = vld [vmem:[#allocation7 + $0x58] sm:$0xf]
    %v1476 = vld [vmem:[#allocation7 + $0x5c] sm:$0xf]
    %v1477 = vld [vmem:[#allocation7 + $0x60] sm:$0xf]
    %v1478 = vld [vmem:[#allocation7 + $0x64] sm:$0xf]
    %v1479 = vld [vmem:[#allocation7 + $0x68] sm:$0xf]
    %v1480 = vld [vmem:[#allocation7 + $0x6c] sm:$0xf]
    %v1481 = vld [vmem:[#allocation7 + $0x70] sm:$0xf]
    %v1482 = vld [vmem:[#allocation7 + $0x74] sm:$0xf]
    %v1483 = vld [vmem:[#allocation7 + $0x78] sm:$0xf]
    %v1484 = vld [vmem:[#allocation7 + $0x7c] sm:$0xf]
    %v1485 = vld [vmem:[#allocation7 + $0x80] sm:$0xf]
    %v1486 = vld [vmem:[#allocation7 + $0x84] sm:$0xf]
    %v1487 = vld [vmem:[#allocation7 + $0x88] sm:$0xf]
    %v1488 = vld [vmem:[#allocation7 + $0x8c] sm:$0xf]
    %v1489 = vld [vmem:[#allocation7 + $0x90] sm:$0xf]
    %v1490 = vld [vmem:[#allocation7 + $0x94] sm:$0xf]
    %v1491 = vld [vmem:[#allocation7 + $0x98] sm:$0xf]
    %v1492 = vld [vmem:[#allocation7 + $0x9c] sm:$0xf]
    %v1493 = vld [vmem:[#allocation7 + $0xa0] sm:$0xf]
    %v1494 = vld [vmem:[#allocation7 + $0xa4] sm:$0xf]
    %v1495 = vld [vmem:[#allocation7 + $0xa8] sm:$0xf]
    %v1496 = vld [vmem:[#allocation7 + $0xac] sm:$0xf]
    %v1497 = vld [vmem:[#allocation7 + $0xb0] sm:$0xf]
    %v1498 = vld [vmem:[#allocation7 + $0xb4] sm:$0xf]
    %v1499 = vld [vmem:[#allocation7 + $0xb8] sm:$0xf]
    %v1500 = vld [vmem:[#allocation7 + $0xbc] sm:$0xf]
    %v1501 = vld [vmem:[%s4] sm:$0x1]
    %v1502 = vunpack.c.l.bf16 %v1501
    %v1503 = vlaneseq
    %v1504 = vshrl.u32 %v1503, 7
    %v1505 = vsub.s32 0, %v1504
    %v1506 = vrot.slane %v1502, %v1505
    %v1555 = vunpack.c.l.b16 %v1453
    %v1556 = vunpack.c.l.b16 %v1454
    %v1557 = vunpack.c.l.b16 %v1455
    %v1558 = vunpack.c.l.b16 %v1456
    %v1559 = vunpack.c.l.b16 %v1457
    %v1560 = vunpack.c.l.b16 %v1458
    %v1561 = vunpack.c.l.b16 %v1459
    %v1562 = vunpack.c.l.b16 %v1460
    %v1563 = vunpack.c.l.b16 %v1461
    %v1564 = vunpack.c.l.b16 %v1462
    %v1565 = vunpack.c.l.b16 %v1463
    %v1566 = vunpack.c.l.b16 %v1464
    %v1567 = vunpack.c.l.b16 %v1465
    %v1568 = vunpack.c.l.b16 %v1466
    %v1569 = vunpack.c.l.b16 %v1467
    %v1570 = vunpack.c.l.b16 %v1468
    %v1571 = vunpack.c.l.b16 %v1469
    %v1572 = vunpack.c.l.b16 %v1470
    %v1573 = vunpack.c.l.b16 %v1471
    %v1574 = vunpack.c.l.b16 %v1472
    %v1575 = vunpack.c.l.b16 %v1473
    %v1576 = vunpack.c.l.b16 %v1474
    %v1577 = vunpack.c.l.b16 %v1475
    %v1578 = vunpack.c.l.b16 %v1476
    %v1579 = vunpack.c.l.b16 %v1477
    %v1580 = vunpack.c.l.b16 %v1478
    %v1581 = vunpack.c.l.b16 %v1479
    %v1582 = vunpack.c.l.b16 %v1480
    %v1583 = vunpack.c.l.b16 %v1481
    %v1584 = vunpack.c.l.b16 %v1482
    %v1585 = vunpack.c.l.b16 %v1483
    %v1586 = vunpack.c.l.b16 %v1484
    %v1587 = vunpack.c.l.b16 %v1485
    %v1588 = vunpack.c.l.b16 %v1486
    %v1589 = vunpack.c.l.b16 %v1487
    %v1590 = vunpack.c.l.b16 %v1488
    %v1591 = vunpack.c.l.b16 %v1489
    %v1592 = vunpack.c.l.b16 %v1490
    %v1593 = vunpack.c.l.b16 %v1491
    %v1594 = vunpack.c.l.b16 %v1492
    %v1595 = vunpack.c.l.b16 %v1493
    %v1596 = vunpack.c.l.b16 %v1494
    %v1597 = vunpack.c.l.b16 %v1495
    %v1598 = vunpack.c.l.b16 %v1496
    %v1599 = vunpack.c.l.b16 %v1497
    %v1600 = vunpack.c.l.b16 %v1498
    %v1601 = vunpack.c.l.b16 %v1499
    %v1602 = vunpack.c.l.b16 %v1500
    %v1603 = vpack.c.b16 %v1556, %v1555
    %v1604 = vpack.c.b16 %v1558, %v1557
    %v1605 = vpack.c.b16 %v1560, %v1559
    %v1606 = vpack.c.b16 %v1562, %v1561
    %v1607 = vpack.c.b16 %v1564, %v1563
    %v1608 = vpack.c.b16 %v1566, %v1565
    %v1609 = vpack.c.b16 %v1568, %v1567
    %v1610 = vpack.c.b16 %v1570, %v1569
    %v1611 = vpack.c.b16 %v1572, %v1571
    %v1612 = vpack.c.b16 %v1574, %v1573
    %v1613 = vpack.c.b16 %v1576, %v1575
    %v1614 = vpack.c.b16 %v1578, %v1577
    %v1615 = vpack.c.b16 %v1580, %v1579
    %v1616 = vpack.c.b16 %v1582, %v1581
    %v1617 = vpack.c.b16 %v1584, %v1583
    %v1618 = vpack.c.b16 %v1586, %v1585
    %v1619 = vpack.c.b16 %v1588, %v1587
    %v1620 = vpack.c.b16 %v1590, %v1589
    %v1621 = vpack.c.b16 %v1592, %v1591
    %v1622 = vpack.c.b16 %v1594, %v1593
    %v1623 = vpack.c.b16 %v1596, %v1595
    %v1624 = vpack.c.b16 %v1598, %v1597
    %v1625 = vpack.c.b16 %v1600, %v1599
    %v1626 = vpack.c.b16 %v1602, %v1601
    %1651 = vmatprep.subr.bf16.mxu0 0
    %1652 = vmatpush1.bf16.msra.mxu0 %v1603
    %1653 = vmatprep.subr.bf16.mxu0 0
    %1654 = vmatpush1.bf16.msra.mxu0 %v1604
    %1655 = vmatprep.subr.bf16.mxu0 0
    %1656 = vmatpush1.bf16.msra.mxu0 %v1605
    %1657 = vmatprep.subr.bf16.mxu0 0
    %1658 = vmatpush1.bf16.msra.mxu0 %v1606
    %1659 = vmatprep.subr.bf16.mxu0 0
    %1660 = vmatpush1.bf16.msra.mxu0 %v1607
    %1661 = vmatprep.subr.bf16.mxu0 0
    %1662 = vmatpush1.bf16.msra.mxu0 %v1608
    %1663 = vmatprep.subr.bf16.mxu0 0
    %1664 = vmatpush1.bf16.msra.mxu0 %v1609
    %1665 = vmatprep.subr.bf16.mxu0 0
    %1666 = vmatpush1.bf16.msra.mxu0 %v1610
    %1667 = vmatprep.subr.bf16.mxu0 0
    %1668 = vmatpush1.bf16.msra.mxu0 %v1611
    %1669 = vmatprep.subr.bf16.mxu0 0
    %1670 = vmatpush1.bf16.msra.mxu0 %v1612
    %1671 = vmatprep.subr.bf16.mxu0 0
    %1672 = vmatpush1.bf16.msra.mxu0 %v1613
    %1673 = vmatprep.subr.bf16.mxu0 0
    %1674 = vmatpush1.bf16.msra.mxu0 %v1614
    %1675 = vmatprep.subr.bf16.mxu0 0
    %1676 = vmatpush1.bf16.msra.mxu0 %v1615
    %1677 = vmatprep.subr.bf16.mxu0 0
    %1678 = vmatpush1.bf16.msra.mxu0 %v1616
    %1679 = vmatprep.subr.bf16.mxu0 0
    %1680 = vmatpush1.bf16.msra.mxu0 %v1617
    %1681 = vmatprep.subr.bf16.mxu0 0
    %1682 = vmatpush1.bf16.msra.mxu0 %v1618
    %1683 = vmatprep.mubr.bf16.mxu0 %v1451
    %1684 = vmatmul.mubr.bf16.gmra.mrb[0].mxu0 %v1450
    %v1685 = vpop.f32.mrb[0].mxu0
    %v1686 = vadd.f32 %v1506, %v1685
    %v1687 = vpop.f32.mrb[0].mxu0
    %v1688 = vpop.f32.mrb[0].mxu0
    %v1689 = vpop.f32.mrb[0].mxu0
    %1690 = vdwg.mxu0
    %1691 = vmatprep.subr.bf16.mxu0 0
    %1692 = vmatpush1.bf16.msra.mxu0 %v1619
    %1693 = vmatprep.subr.bf16.mxu0 0
    %1694 = vmatpush1.bf16.msra.mxu0 %v1620
    %1695 = vmatprep.subr.bf16.mxu0 0
    %1696 = vmatpush1.bf16.msra.mxu0 %v1621
    %1697 = vmatprep.subr.bf16.mxu0 0
    %1698 = vmatpush1.bf16.msra.mxu0 %v1622
    %1699 = vmatprep.subr.bf16.mxu0 0
    %1700 = vmatpush1.bf16.msra.mxu0 %v1623
    %1701 = vmatprep.subr.bf16.mxu0 0
    %1702 = vmatpush1.bf16.msra.mxu0 %v1624
    %1703 = vmatprep.subr.bf16.mxu0 0
    %1704 = vmatpush1.bf16.msra.mxu0 %v1625
    %1705 = vmatprep.subr.bf16.mxu0 0
    %1706 = vmatpush1.bf16.msra.mxu0 %v1626
    %1707 = vmatprep.subr.bf16.mxu0 0
    %1708 = vmatpush1.bf16.msra.mxu0 0
    %1709 = vmatprep.subr.bf16.mxu0 0
    %1710 = vmatpush1.bf16.msra.mxu0 0
    %1711 = vmatprep.subr.bf16.mxu0 0
    %1712 = vmatpush1.bf16.msra.mxu0 0
    %1713 = vmatprep.subr.bf16.mxu0 0
    %1714 = vmatpush1.bf16.msra.mxu0 0
    %1715 = vmatprep.subr.bf16.mxu0 0
    %1716 = vmatpush1.bf16.msra.mxu0 0
    %1717 = vmatprep.subr.bf16.mxu0 0
    %1718 = vmatpush1.bf16.msra.mxu0 0
    %1719 = vmatprep.subr.bf16.mxu0 0
    %1720 = vmatpush1.bf16.msra.mxu0 0
    %1721 = vmatprep.subr.bf16.mxu0 0
    %1722 = vmatpush1.bf16.msra.mxu0 0
    %1723 = vmatprep.mubr.bf16.mxu0 0
    %1724 = vmatmul.mubr.bf16.gmra.mrb[0].mxu0 %v1452
    %v1725 = vpop.f32.mrb[0].mxu0
    %v1726 = vadd.f32 %v1686, %v1725
    %v1727 = vpop.f32.mrb[0].mxu0
    %v1728 = vpop.f32.mrb[0].mxu0
    %v1729 = vpop.f32.mrb[0].mxu0
    %1730 = vdwg.mxu0
    %v1731 = vmax.f32 %v1726, 0.0
    %v1732 = vpack.c.bf16 %v1731, %v1731
    %v1733 = vld [vmem:[#allocation8] sm:$0xf]
    %v1734 = vld [vmem:[#allocation8 + $0x4] sm:$0xf]
    %v1735 = vld [vmem:[#allocation8 + $0x8] sm:$0xf]
    %v1736 = vld [vmem:[#allocation8 + $0xc] sm:$0xf]
    %v1737 = vld [vmem:[#allocation8 + $0x10] sm:$0xf]
    %v1738 = vld [vmem:[#allocation8 + $0x14] sm:$0xf]
    %v1739 = vld [vmem:[#allocation8 + $0x18] sm:$0xf]
    %v1740 = vld [vmem:[#allocation8 + $0x1c] sm:$0xf]
    %v1741 = vld [vmem:[#allocation8 + $0x20] sm:$0xf]
    %v1742 = vld [vmem:[#allocation8 + $0x24] sm:$0xf]
    %v1743 = vld [vmem:[#allocation8 + $0x28] sm:$0xf]
    %v1744 = vld [vmem:[#allocation8 + $0x2c] sm:$0xf]
    %v1745 = vld [vmem:[#allocation8 + $0x30] sm:$0xf]
    %v1746 = vld [vmem:[#allocation8 + $0x34] sm:$0xf]
    %v1747 = vld [vmem:[#allocation8 + $0x38] sm:$0xf]
    %v1748 = vld [vmem:[#allocation8 + $0x3c] sm:$0xf]
    %v1749 = vld [vmem:[%s6] sm:$0x1]
    %v1750 = vunpack.c.l.bf16 %v1749
    %v1751 = vlaneseq
    %v1752 = vshrl.u32 %v1751, 7
    %v1753 = vsub.s32 0, %v1752
    %v1754 = vrot.slane %v1750, %v1753
    %v1771 = vunpack.c.l.b16 %v1733
    %v1772 = vunpack.c.l.b16 %v1734
    %v1773 = vunpack.c.l.b16 %v1735
    %v1774 = vunpack.c.l.b16 %v1736
    %v1775 = vunpack.c.l.b16 %v1737
    %v1776 = vunpack.c.l.b16 %v1738
    %v1777 = vunpack.c.l.b16 %v1739
    %v1778 = vunpack.c.l.b16 %v1740
    %v1779 = vunpack.c.l.b16 %v1741
    %v1780 = vunpack.c.l.b16 %v1742
    %v1781 = vunpack.c.l.b16 %v1743
    %v1782 = vunpack.c.l.b16 %v1744
    %v1783 = vunpack.c.l.b16 %v1745
    %v1784 = vunpack.c.l.b16 %v1746
    %v1785 = vunpack.c.l.b16 %v1747
    %v1786 = vunpack.c.l.b16 %v1748
    %v1787 = vpack.c.b16 %v1772, %v1771
    %v1788 = vpack.c.b16 %v1774, %v1773
    %v1789 = vpack.c.b16 %v1776, %v1775
    %v1790 = vpack.c.b16 %v1778, %v1777
    %v1791 = vpack.c.b16 %v1780, %v1779
    %v1792 = vpack.c.b16 %v1782, %v1781
    %v1793 = vpack.c.b16 %v1784, %v1783
    %v1794 = vpack.c.b16 %v1786, %v1785
    %1803 = vmatprep.subr.bf16.mxu0 0
    %1804 = vmatpush1.bf16.msra.mxu0 %v1787
    %1805 = vmatprep.subr.bf16.mxu0 0
    %1806 = vmatpush1.bf16.msra.mxu0 %v1788
    %1807 = vmatprep.subr.bf16.mxu0 0
    %1808 = vmatpush1.bf16.msra.mxu0 %v1789
    %1809 = vmatprep.subr.bf16.mxu0 0
    %1810 = vmatpush1.bf16.msra.mxu0 %v1790
    %1811 = vmatprep.subr.bf16.mxu0 0
    %1812 = vmatpush1.bf16.msra.mxu0 %v1791
    %1813 = vmatprep.subr.bf16.mxu0 0
    %1814 = vmatpush1.bf16.msra.mxu0 %v1792
    %1815 = vmatprep.subr.bf16.mxu0 0
    %1816 = vmatpush1.bf16.msra.mxu0 %v1793
    %1817 = vmatprep.subr.bf16.mxu0 0
    %1818 = vmatpush1.bf16.msra.mxu0 %v1794
    %1819 = vmatprep.subr.bf16.mxu0 0
    %1820 = vmatpush1.bf16.msra.mxu0 0
    %1821 = vmatprep.subr.bf16.mxu0 0
    %1822 = vmatpush1.bf16.msra.mxu0 0
    %1823 = vmatprep.subr.bf16.mxu0 0
    %1824 = vmatpush1.bf16.msra.mxu0 0
    %1825 = vmatprep.subr.bf16.mxu0 0
    %1826 = vmatpush1.bf16.msra.mxu0 0
    %1827 = vmatprep.subr.bf16.mxu0 0
    %1828 = vmatpush1.bf16.msra.mxu0 0
    %1829 = vmatprep.subr.bf16.mxu0 0
    %1830 = vmatpush1.bf16.msra.mxu0 0
    %1831 = vmatprep.subr.bf16.mxu0 0
    %1832 = vmatpush1.bf16.msra.mxu0 0
    %1833 = vmatprep.subr.bf16.mxu0 0
    %1834 = vmatpush1.bf16.msra.mxu0 0
    %1835 = vmatprep.mubr.bf16.mxu0 0
    %1836 = vmatmul.mubr.bf16.gmra.mrb[0].mxu0 %v1732
    %v1837 = vpop.f32.mrb[0].mxu0
    %v1838 = vadd.f32 %v1754, %v1837
    %v1839 = vpop.f32.mrb[0].mxu0
    %v1840 = vpop.f32.mrb[0].mxu0
    %v1841 = vpop.f32.mrb[0].mxu0
    %1842 = vdwg.mxu0
    %v1843 = vpack.c.bf16 %v1838, %v1838
    %1844 = vst [vmem:[#allocation10] sm:$0xf] %v1843
    // Predicated region
    $region46: #{tpu_custom_call.1} parent=1 // pred_check
      _
    $region47: #{tpu_custom_call.1} parent=1 // pred_check_branch
      %1846 = sbr.rel (0) target = $region49
    $region48: #{tpu_custom_call.1} parent=1 // pred_region
      %s1848 = ssub.s32 64, 64
      %1849 = vsyncadd [#allocation4], %s1848
      %s1851 = sshll.u32 [#allocation10], 4
      %s1852 = int_to_ptr.vmem [resolvable:$true] %s1851
      %1854 = dma.vmem_to_hbm [thread:$0]  %s1852, 64, %s7, [#allocation4]
    $region49: #{tpu_custom_call.1} parent=1 // pred_fallthru
      _
    // Predicated region
    $region50: #{tpu_custom_call.1} parent=1 // pred_check
      _
    $region51: #{tpu_custom_call.1} parent=1 // pred_check_branch
      %1856 = sbr.rel (0) target = $region53
    $region52: #{tpu_custom_call.1} parent=1 // pred_region
      %1857 = dma.done [#allocation4], 64
    $region53: #{tpu_custom_call.1} parent=1 // pred_fallthru
      _
    %1858 = vsyncpa [#allocation3], 1
    %1859 = vsyncpa [#allocation6], 1
    %1860 = vsyncpa [#allocation9], 1
    %1861 = vsyncpa [#allocation4], 1

</llo_original>
